<compile_context>
chip_gen: v6e
topology: v6e:2x2x1
jax: 0.10.0
libtpu: 0.0.40
codegen_flags: <defaults>
</compile_context>

<pallas_src>
import jax
import jax.numpy as jnp
from jax import lax
from jax.experimental import pallas as pl
from jax.experimental.pallas import tpu as pltpu

EPS = 1e-5


def _fused_kernel(x1_ref, x2_ref, w_ref, gamma_ref, beta_ref, o_ref):
    # x1_ref, x2_ref     : [Cin, M]   (M = N*H*W, lane axis) -- resident, constant block
    # w_ref              : [TC, Cin]  (per-tile slice of the 1x1-conv weight)
    # gamma_ref/beta_ref : [TC, 1]
    # o_ref              : [TC, M]

    # elementwise add (x101 = x100 + x86)
    x = x1_ref[...] + x2_ref[...]

    # 1x1 conv == matmul on the MXU (x102): [TC, Cin] @ [Cin, M]
    y = jnp.dot(w_ref[...], x, preferred_element_type=jnp.float32)

    # BatchNorm2d, training mode (x103): one-pass batch stats per channel.
    m = y.shape[1]
    inv_m = 1.0 / m
    s1 = jnp.sum(y, axis=1, keepdims=True)        # [TC, 1]
    s2 = jnp.sum(y * y, axis=1, keepdims=True)    # [TC, 1]
    mean = s1 * inv_m
    var = s2 * inv_m - mean * mean                # biased variance (PyTorch BN)
    inv_std = lax.rsqrt(var + EPS)

    # Fold gamma / inv_std / mean / beta into per-channel scale & shift.
    scale = gamma_ref[...] * inv_std              # [TC, 1]
    shift = beta_ref[...] - mean * scale          # [TC, 1]

    o_ref[...] = (y * scale + shift).astype(o_ref.dtype)


def _pick_cout_tile(cout):
    # Prefer 2 tiles of 144 (even tile count for v7x megacore), then 96;
    # fall back to a single tile if Cout has no nice divisor.
    for tc in (144, 96, 128, 64, 32, 16, 8):
        if cout % tc == 0:
            return tc
    return cout


def fused_add_conv1x1_bn(x100, x86, weight, gamma, beta):
    """x100, x86: [N, Cin, H, W] (NCHW, like PyTorch).
    weight: [Cout, Cin, 1, 1]. gamma, beta: [Cout]. Returns [N, Cout, H, W]."""
    N, Cin, H, W = x100.shape
    Cout = weight.shape[0]
    M = N * H * W
    TC = _pick_cout_tile(Cout)
    n_tiles = Cout // TC

    def to_cm(x):
        # NCHW -> [Cin, M]; for N == 1 this is a pure reshape (no data movement).
        if N == 1:
            return x.reshape(Cin, M)
        # TODO(synk): N > 1 takes one transpose here; fold it into an M-tiled
        # two-pass kernel if this path ever becomes hot.
        return jnp.transpose(x.reshape(N, Cin, H * W), (1, 0, 2)).reshape(Cin, M)

    x1 = to_cm(x100)
    x2 = to_cm(x86)
    w = weight.reshape(Cout, Cin)                 # [Cout, Cin]
    g = gamma.reshape(Cout, 1)
    b = beta.reshape(Cout, 1)

    out_cm = pl.pallas_call(
        _fused_kernel,
        out_shape=jax.ShapeDtypeStruct((Cout, M), jnp.float32),
        grid_spec=pltpu.PrefetchScalarGridSpec(
            num_scalar_prefetch=0,
            grid=(n_tiles,),
            in_specs=[
                # x1 / x2: constant block index -> DMA'd once, stays resident.
                pl.BlockSpec((Cin, M), lambda i: (0, 0)),
                pl.BlockSpec((Cin, M), lambda i: (0, 0)),
                # Per-tile weight / affine params.
                pl.BlockSpec((TC, Cin), lambda i: (i, 0)),
                pl.BlockSpec((TC, 1), lambda i: (i, 0)),
                pl.BlockSpec((TC, 1), lambda i: (i, 0)),
            ],
            out_specs=pl.BlockSpec((TC, M), lambda i: (i, 0)),
        ),
        compiler_params=pltpu.CompilerParams(
            # Cout tiles are independent (stats are per channel) -> safe to
            # shard across v7x's two TensorCores; no-op on v5e/v6e.
            dimension_semantics=("parallel",),
        ),
    )(x1, x2, w, g, b)

    # [Cout, M] -> NCHW; pure reshape when N == 1.
    if N == 1:
        return out_cm.reshape(1, Cout, H, W)
    return jnp.transpose(out_cm.reshape(Cout, N, H, W), (1, 0, 2, 3))


def reference(x100, x86, weight, gamma, beta):
    """Pure-JAX reference for a correctness check."""
    x = x100 + x86
    N, Cin, H, W = x.shape
    Cout = weight.shape[0]
    xr = jnp.transpose(x, (0, 2, 3, 1)).reshape(-1, Cin)
    y = xr @ weight.reshape(Cout, Cin).T
    mean = jnp.mean(y, axis=0, keepdims=True)
    var = jnp.mean((y - mean) ** 2, axis=0, keepdims=True)
    y = (y - mean) / jnp.sqrt(var + EPS) * gamma[None, :] + beta[None, :]
    return jnp.transpose(y.reshape(N, H, W, Cout), (0, 3, 1, 2))


if __name__ == "__main__":
    key = jax.random.PRNGKey(0)
    k1, k2, k3, k4, k5 = jax.random.split(key, 5)

    # Shapes implied by the module's forward: x100/x86 [1,48,28,28], Cout=288.
    N, Cin, H, W, Cout = 1, 48, 28, 28, 288

    x100 = jax.random.normal(k1, (N, Cin, H, W), dtype=jnp.float32)
    x86 = jax.random.normal(k2, (N, Cin, H, W), dtype=jnp.float32)

    # Deterministic parameter init (synthetic; shapes match the module).
    weight = jax.random.normal(k3, (Cout, Cin, 1, 1), dtype=jnp.float32) * 0.05
    gamma = 1.0 + 0.1 * jax.random.normal(k4, (Cout,), dtype=jnp.float32)
    beta = 0.1 * jax.random.normal(k5, (Cout,), dtype=jnp.float32)

    out = fused_add_conv1x1_bn(x100, x86, weight, gamma, beta)
    out = jax.block_until_ready(out)

    ref = jax.block_until_ready(reference(x100, x86, weight, gamma, beta))
    assert out.shape == (N, Cout, H, W)
    assert jnp.allclose(out, ref, atol=2e-3, rtol=2e-3)

    print("KERNEL_OK")
</pallas_src>

<mosaic_0001>
module attributes {stable_mosaic.version = 11 : i64} {
  func.func @_fused_kernel(%arg0: i32, %arg1: memref<48x784xf32, #tpu.memory_space<vmem>>, %arg2: memref<48x784xf32, #tpu.memory_space<vmem>>, %arg3: memref<144x48xf32, #tpu.memory_space<vmem>>, %arg4: memref<144x1xf32, #tpu.memory_space<vmem>>, %arg5: memref<144x1xf32, #tpu.memory_space<vmem>>, %arg6: memref<144x784xf32, #tpu.memory_space<vmem>>) attributes {dimension_semantics = [#tpu.dimension_semantics<parallel>], iteration_bounds = array<i64: 2>, scalar_prefetch = 0 : i64, scratch_operands = 0 : i64, tpu.core_type = #tpu.core_type<tc>, window_params = [{pipeline_mode = #tpu.pipeline_mode<synchronous>, transform_indices = @transform_0, window_bounds = array<i64: 48, 784>}, {pipeline_mode = #tpu.pipeline_mode<synchronous>, transform_indices = @transform_1, window_bounds = array<i64: 48, 784>}, {transform_indices = @transform_2, window_bounds = array<i64: 144, 48>}, {transform_indices = @transform_3, window_bounds = array<i64: 144, 1>}, {transform_indices = @transform_4, window_bounds = array<i64: 144, 1>}, {transform_indices = @transform_5, window_bounds = array<i64: 144, 784>}]} {
    %c0 = arith.constant 0 : index
    %c0_0 = arith.constant 0 : index
    %0 = vector.load %arg1[%c0, %c0_0] : memref<48x784xf32, #tpu.memory_space<vmem>>, vector<48x784xf32>
    %c0_1 = arith.constant 0 : index
    %c0_2 = arith.constant 0 : index
    %1 = vector.load %arg2[%c0_1, %c0_2] : memref<48x784xf32, #tpu.memory_space<vmem>>, vector<48x784xf32>
    %2 = arith.addf %0, %1 : vector<48x784xf32>
    %c0_3 = arith.constant 0 : index
    %c0_4 = arith.constant 0 : index
    %3 = vector.load %arg3[%c0_3, %c0_4] : memref<144x48xf32, #tpu.memory_space<vmem>>, vector<144x48xf32>
    %cst = arith.constant dense<0.000000e+00> : vector<144x784xf32>
    %4 = tpu.matmul %3, %2, %cst {dimension_numbers = #tpu.dot_dimension_numbers<[1], [0], [0], [1], [0, 0, 1, 1], [], []>} : vector<144x48xf32>, vector<48x784xf32>, vector<144x784xf32> -> vector<144x784xf32>
    %cst_5 = arith.constant dense<0.000000e+00> : vector<144xf32>
    %5 = vector.multi_reduction <add>, %4, %cst_5 [1] : vector<144x784xf32> to vector<144xf32>
    %6 = vector.shape_cast %5 : vector<144xf32> to vector<144x1xf32>
    %7 = arith.mulf %4, %4 : vector<144x784xf32>
    %cst_6 = arith.constant dense<0.000000e+00> : vector<144xf32>
    %8 = vector.multi_reduction <add>, %7, %cst_6 [1] : vector<144x784xf32> to vector<144xf32>
    %9 = vector.shape_cast %8 : vector<144xf32> to vector<144x1xf32>
    %cst_7 = arith.constant 0.00127551018 : f32
    %10 = vector.broadcast %cst_7 : f32 to vector<144x1xf32>
    %11 = arith.mulf %6, %10 : vector<144x1xf32>
    %cst_8 = arith.constant 0.00127551018 : f32
    %12 = vector.broadcast %cst_8 : f32 to vector<144x1xf32>
    %13 = arith.mulf %9, %12 : vector<144x1xf32>
    %14 = arith.mulf %11, %11 : vector<144x1xf32>
    %15 = arith.subf %13, %14 : vector<144x1xf32>
    %cst_9 = arith.constant 9.99999974E-6 : f32
    %16 = vector.broadcast %cst_9 : f32 to vector<144x1xf32>
    %17 = arith.addf %15, %16 : vector<144x1xf32>
    %18 = math.rsqrt %17 : vector<144x1xf32>
    %c0_10 = arith.constant 0 : index
    %c0_11 = arith.constant 0 : index
    %19 = vector.load %arg4[%c0_10, %c0_11] : memref<144x1xf32, #tpu.memory_space<vmem>>, vector<144x1xf32>
    %20 = arith.mulf %19, %18 : vector<144x1xf32>
    %c0_12 = arith.constant 0 : index
    %c0_13 = arith.constant 0 : index
    %21 = vector.load %arg5[%c0_12, %c0_13] : memref<144x1xf32, #tpu.memory_space<vmem>>, vector<144x1xf32>
    %22 = arith.mulf %11, %20 : vector<144x1xf32>
    %23 = arith.subf %21, %22 : vector<144x1xf32>
    %24 = vector.broadcast %20 : vector<144x1xf32> to vector<144x784xf32>
    %25 = arith.mulf %4, %24 : vector<144x784xf32>
    %26 = vector.broadcast %23 : vector<144x1xf32> to vector<144x784xf32>
    %27 = arith.addf %25, %26 : vector<144x784xf32>
    %c0_14 = arith.constant 0 : index
    %c0_15 = arith.constant 0 : index
    %28 = vector.load %arg6[%c0_14, %c0_15] : memref<144x784xf32, #tpu.memory_space<vmem>>, vector<144x784xf32>
    tpu.vector_store %arg6[%c0_14, %c0_15], %27 {strides = array<i32>} : memref<144x784xf32, #tpu.memory_space<vmem>>, vector<144x784xf32>,
    return
  }
  func.func @transform_0(%arg0: i32) -> (i32, i32) {
    %c0_i32 = arith.constant 0 : i32
    %c0_i32_0 = arith.constant 0 : i32
    %c0_i32_1 = arith.constant 0 : i32
    return %c0_i32, %c0_i32_0 : i32, i32
  }
  func.func @transform_1(%arg0: i32) -> (i32, i32) {
    %c0_i32 = arith.constant 0 : i32
    %c0_i32_0 = arith.constant 0 : i32
    %c0_i32_1 = arith.constant 0 : i32
    return %c0_i32, %c0_i32_0 : i32, i32
  }
  func.func @transform_2(%arg0: i32) -> (i32, i32) {
    %c0_i32 = arith.constant 0 : i32
    %c0_i32_0 = arith.constant 0 : i32
    return %arg0, %c0_i32 : i32, i32
  }
  func.func @transform_3(%arg0: i32) -> (i32, i32) {
    %c0_i32 = arith.constant 0 : i32
    %c0_i32_0 = arith.constant 0 : i32
    return %arg0, %c0_i32 : i32, i32
  }
  func.func @transform_4(%arg0: i32) -> (i32, i32) {
    %c0_i32 = arith.constant 0 : i32
    %c0_i32_0 = arith.constant 0 : i32
    return %arg0, %c0_i32 : i32, i32
  }
  func.func @transform_5(%arg0: i32) -> (i32, i32) {
    %c0_i32 = arith.constant 0 : i32
    %c0_i32_0 = arith.constant 0 : i32
    return %arg0, %c0_i32 : i32, i32
  }
}

</mosaic_0001>

<llo_original>
// kernel: tpu_custom_call.1
$region0: #{tpu_custom_call.1}
  #allocation0 [shape = 'u32[]', space=smem, size = 0x4, offset = 0x4, fixed_abs, tag = 'smem constant byte address 0x4 - core index']
  #allocation1 [shape = 'u32[144,128]{1,0:T(1,128)}', space=vmem, size = 0x12000, scoped, tag = 'internal scratch']
  %s0 = inlined_call_operand.vmem [shape: f32[48,784], index: 0, kind: input, shape index: {}]
  %s1 = inlined_call_operand.vmem [shape: f32[48,784], index: 1, kind: input, shape index: {}]
  %s2 = inlined_call_operand.vmem [shape: f32[288,48], index: 2, kind: input, shape index: {}]
  %s3 = inlined_call_operand.vmem [shape: f32[288,1], index: 3, kind: input, shape index: {}]
  %s4 = inlined_call_operand.vmem [shape: f32[288,1], index: 4, kind: input, shape index: {}]
  %s5 = inlined_call_operand.hbm [shape: f32[288,784], index: 5, kind: output, shape index: {}]
  %s6 = sld [smem:[#allocation0]]
  $region53: #{tpu_custom_call.1} parent=0
    _
  %s8 = ssub.s32 1, %s6
  %s9 = scalar_select 0, %s8, %s6
  $region1: #{tpu_custom_call.1} parent=0
    #allocation2 [shape = 'u8[1032192]{0}', space=vmem, size = 0xfc000, scoped, tag = 'output window, operand 0']
    #allocation3 [shape = 's32[2]{0}', space=sflag, size = 0x8, scoped, tag = 'scoped memory for tpu_custom_call.1']
    %10 = vsyncpa [#allocation3], 0
    %s11 = scalar_lea.sflag [#allocation3], 1
    %12 = vsyncpa %s11, 0
    loop: start=0, step=1, limit=4
    $region2: #{tpu_custom_call.1} parent=1 // loop_pre_header
      _
    $region3: #{tpu_custom_call.1} parent=1 // loop_header
      %s14 = sphi 0, %s18
      %p15 = scmp.ge.s32.totalorder %s14, 4
      %s22 = sphi 0, %s22
      %s24 = sphi 0, %s22
      %s25 = sphi 0, %s24
      %s39 = sphi 0, %s25
      %s43 = sphi 0, %s43
      %s45 = sphi 0, %s43
      %s46 = sphi 0, %s45
      %s60 = sphi 0, %s46
      %s66 = sphi 0, %s68
      %s69 = sphi 0, %s66
      %s70 = sphi 0, %s69
      %s86 = sphi 0, %s70
      %s92 = sphi 0, %s94
      %s95 = sphi 0, %s92
      %s96 = sphi 0, %s95
      %s112 = sphi 0, %s96
      %s118 = sphi 0, %s120
      %s121 = sphi 0, %s118
      %s122 = sphi 0, %s121
      %s138 = sphi 0, %s122
      %s144 = sphi 0, %s146
      %s147 = sphi 0, %s144
      %s148 = sphi 0, %s147
      %s164 = sphi 0, %s148
    $region4: #{tpu_custom_call.1} parent=1 // loop_header_branch
      %17 = sbr.rel (%p15) target = $region8
    $region5: #{tpu_custom_call.1} parent=1 // loop_body
      %s19 = ssub.s32 %s14, 1
      %s20 = ssub.s32 %s14, 2
      %s21 = sadd.s32 %s14, 1
      %s23 = sadd.s32 %s22, 1
      %p26 = scmp.eq.s32.totalorder %s14, 1
      %p27 = scmp.ne.s32.totalorder %s22, %s24
      %p28 = scmp.eq.s32.totalorder %s14, 0
      %p29 = por %p27, %p28
      %p30 = scmp.ne.s32.totalorder %s22, %s24
      %p31 = scmp.eq.s32.totalorder %s19, 1
      %p32 = por %p30, %p31
      %p33 = scmp.ne.s32.totalorder %s24, %s25
      %p34 = scmp.eq.s32.totalorder %s19, 0
      %p35 = por %p33, %p34
      %p36 = scmp.ne.s32.totalorder %s24, %s25
      %p37 = scmp.eq.s32.totalorder %s20, 1
      %p38 = por %p36, %p37
      %p40 = scmp.ne.s32.totalorder %s25, %s39
      %p41 = scmp.eq.s32.totalorder %s20, 0
      %p42 = por %p40, %p41
      %s44 = sadd.s32 %s43, 1
      %p47 = scmp.eq.s32.totalorder %s14, 1
      %p48 = scmp.ne.s32.totalorder %s43, %s45
      %p49 = scmp.eq.s32.totalorder %s14, 0
      %p50 = por %p48, %p49
      %p51 = scmp.ne.s32.totalorder %s43, %s45
      %p52 = scmp.eq.s32.totalorder %s19, 1
      %p53 = por %p51, %p52
      %p54 = scmp.ne.s32.totalorder %s45, %s46
      %p55 = scmp.eq.s32.totalorder %s19, 0
      %p56 = por %p54, %p55
      %p57 = scmp.ne.s32.totalorder %s45, %s46
      %p58 = scmp.eq.s32.totalorder %s20, 1
      %p59 = por %p57, %p58
      %p61 = scmp.ne.s32.totalorder %s46, %s60
      %p62 = scmp.eq.s32.totalorder %s20, 0
      %p63 = por %p61, %p62
      %s64 = ssub.s32 %s14, %s21
      %p65 = scmp.eq.s32.totalorder %s64, 0
      %s67 = sadd.s32 %s66, 1
      %s68 = scalar_select %p65, %s66, %s67
      %p71 = pneg %p65
      %p72 = scmp.eq.s32.totalorder %s14, 1
      %p73 = por %p71, %p72
      %p74 = scmp.ne.s32.totalorder %s66, %s69
      %p75 = scmp.eq.s32.totalorder %s14, 0
      %p76 = por %p74, %p75
      %p77 = scmp.ne.s32.totalorder %s66, %s69
      %p78 = scmp.eq.s32.totalorder %s19, 1
      %p79 = por %p77, %p78
      %p80 = scmp.ne.s32.totalorder %s69, %s70
      %p81 = scmp.eq.s32.totalorder %s19, 0
      %p82 = por %p80, %p81
      %p83 = scmp.ne.s32.totalorder %s69, %s70
      %p84 = scmp.eq.s32.totalorder %s20, 1
      %p85 = por %p83, %p84
      %p87 = scmp.ne.s32.totalorder %s70, %s86
      %p88 = scmp.eq.s32.totalorder %s20, 0
      %p89 = por %p87, %p88
      %s90 = ssub.s32 %s14, %s21
      %p91 = scmp.eq.s32.totalorder %s90, 0
      %s93 = sadd.s32 %s92, 1
      %s94 = scalar_select %p91, %s92, %s93
      %p97 = pneg %p91
      %p98 = scmp.eq.s32.totalorder %s14, 1
      %p99 = por %p97, %p98
      %p100 = scmp.ne.s32.totalorder %s92, %s95
      %p101 = scmp.eq.s32.totalorder %s14, 0
      %p102 = por %p100, %p101
      %p103 = scmp.ne.s32.totalorder %s92, %s95
      %p104 = scmp.eq.s32.totalorder %s19, 1
      %p105 = por %p103, %p104
      %p106 = scmp.ne.s32.totalorder %s95, %s96
      %p107 = scmp.eq.s32.totalorder %s19, 0
      %p108 = por %p106, %p107
      %p109 = scmp.ne.s32.totalorder %s95, %s96
      %p110 = scmp.eq.s32.totalorder %s20, 1
      %p111 = por %p109, %p110
      %p113 = scmp.ne.s32.totalorder %s96, %s112
      %p114 = scmp.eq.s32.totalorder %s20, 0
      %p115 = por %p113, %p114
      %s116 = ssub.s32 %s14, %s21
      %p117 = scmp.eq.s32.totalorder %s116, 0
      %s119 = sadd.s32 %s118, 1
      %s120 = scalar_select %p117, %s118, %s119
      %p123 = pneg %p117
      %p124 = scmp.eq.s32.totalorder %s14, 1
      %p125 = por %p123, %p124
      %p126 = scmp.ne.s32.totalorder %s118, %s121
      %p127 = scmp.eq.s32.totalorder %s14, 0
      %p128 = por %p126, %p127
      %p129 = scmp.ne.s32.totalorder %s118, %s121
      %p130 = scmp.eq.s32.totalorder %s19, 1
      %p131 = por %p129, %p130
      %p132 = scmp.ne.s32.totalorder %s121, %s122
      %p133 = scmp.eq.s32.totalorder %s19, 0
      %p134 = por %p132, %p133
      %p135 = scmp.ne.s32.totalorder %s121, %s122
      %p136 = scmp.eq.s32.totalorder %s20, 1
      %p137 = por %p135, %p136
      %p139 = scmp.ne.s32.totalorder %s122, %s138
      %p140 = scmp.eq.s32.totalorder %s20, 0
      %p141 = por %p139, %p140
      %s142 = ssub.s32 %s14, %s21
      %p143 = scmp.eq.s32.totalorder %s142, 0
      %s145 = sadd.s32 %s144, 1
      %s146 = scalar_select %p143, %s144, %s145
      %p149 = pneg %p143
      %p150 = scmp.eq.s32.totalorder %s14, 1
      %p151 = por %p149, %p150
      %p152 = scmp.ne.s32.totalorder %s144, %s147
      %p153 = scmp.eq.s32.totalorder %s14, 0
      %p154 = por %p152, %p153
      %p155 = scmp.ne.s32.totalorder %s144, %s147
      %p156 = scmp.eq.s32.totalorder %s19, 1
      %p157 = por %p155, %p156
      %p158 = scmp.ne.s32.totalorder %s147, %s148
      %p159 = scmp.eq.s32.totalorder %s19, 0
      %p160 = por %p158, %p159
      %p161 = scmp.ne.s32.totalorder %s147, %s148
      %p162 = scmp.eq.s32.totalorder %s20, 1
      %p163 = por %p161, %p162
      %p165 = scmp.ne.s32.totalorder %s148, %s164
      %p166 = scmp.eq.s32.totalorder %s20, 0
      %p167 = por %p165, %p166
      %p168 = scmp.le.s32.totalorder 1, %s14
      %p169 = scmp.lt.s32.totalorder %s14, 3
      %p170 = pnand %p168, %p169
      %p171 = pneg %p170
      // Predicated region
      $region9: #{tpu_custom_call.1} parent=5 // pred_check
        _
      $region10: #{tpu_custom_call.1} parent=5 // pred_check_branch
        %173 = sbr.rel (%p170) target = $region12
      $region11: #{tpu_custom_call.1} parent=5 // pred_region
        %s174 = ssub.s32 %s14, 1
        // Predicated region
        $region13: #{tpu_custom_call.1} parent=11 // pred_check
          %p175 = pneg %p35
        $region14: #{tpu_custom_call.1} parent=11 // pred_check_branch
          %177 = sbr.rel (%p175) target = $region16
        $region15: #{tpu_custom_call.1} parent=11 // pred_region
          _
        $region16: #{tpu_custom_call.1} parent=11 // pred_fallthru
          _
        // Predicated region
        $region17: #{tpu_custom_call.1} parent=11 // pred_check
          %p178 = pneg %p56
        $region18: #{tpu_custom_call.1} parent=11 // pred_check_branch
          %180 = sbr.rel (%p178) target = $region20
        $region19: #{tpu_custom_call.1} parent=11 // pred_region
          _
        $region20: #{tpu_custom_call.1} parent=11 // pred_fallthru
          _
      $region12: #{tpu_custom_call.1} parent=5 // pred_fallthru
        _
      %p181 = scmp.lt.s32.totalorder %s14, 2
      // Predicated region
      $region21: #{tpu_custom_call.1} parent=5 // pred_check
        %p182 = pneg %p181
      $region22: #{tpu_custom_call.1} parent=5 // pred_check_branch
        %184 = sbr.rel (%p182) target = $region24
      $region23: #{tpu_custom_call.1} parent=5 // pred_region
        // Predicated region
        $region25: #{tpu_custom_call.1} parent=23 // pred_check
          %p185 = pneg %p76
        $region26: #{tpu_custom_call.1} parent=23 // pred_check_branch
          %187 = sbr.rel (%p185) target = $region28
        $region27: #{tpu_custom_call.1} parent=23 // pred_region
          %s188 = smul.u32 18, %s14
          %p189 = scmp.lt.s32.totalorder %s188, 35
          %s190 = scalar_select %p189, %s188, 35
          %s191 = smul.addr %s190, 8
          %s192 = scalar_lea.vmem %s2, %s191
          %s193 = smul.u32 18, %s14
        $region28: #{tpu_custom_call.1} parent=23 // pred_fallthru
          _
        // Predicated region
        $region29: #{tpu_custom_call.1} parent=23 // pred_check
          %p194 = pneg %p102
        $region30: #{tpu_custom_call.1} parent=23 // pred_check_branch
          %196 = sbr.rel (%p194) target = $region32
        $region31: #{tpu_custom_call.1} parent=23 // pred_region
          %s197 = smul.u32 18, %s14
          %p198 = scmp.lt.s32.totalorder %s197, 35
          %s199 = scalar_select %p198, %s197, 35
          %s200 = smul.addr %s199, 8
          %s201 = scalar_lea.vmem %s3, %s200
          %s202 = smul.u32 18, %s14
        $region32: #{tpu_custom_call.1} parent=23 // pred_fallthru
          _
        // Predicated region
        $region33: #{tpu_custom_call.1} parent=23 // pred_check
          %p203 = pneg %p128
        $region34: #{tpu_custom_call.1} parent=23 // pred_check_branch
          %205 = sbr.rel (%p203) target = $region36
        $region35: #{tpu_custom_call.1} parent=23 // pred_region
          %s206 = smul.u32 18, %s14
          %p207 = scmp.lt.s32.totalorder %s206, 35
          %s208 = scalar_select %p207, %s206, 35
          %s209 = smul.addr %s208, 8
          %s210 = scalar_lea.vmem %s4, %s209
          %s211 = smul.u32 18, %s14
        $region36: #{tpu_custom_call.1} parent=23 // pred_fallthru
          _
      $region24: #{tpu_custom_call.1} parent=5 // pred_fallthru
        _
      %p212 = scmp.le.s32.totalorder 1, %s14
      %p213 = scmp.lt.s32.totalorder %s14, 3
      %p214 = pnand %p212, %p213
      %p215 = pneg %p214
      // Predicated region
      $region37: #{tpu_custom_call.1} parent=5 // pred_check
        _
      $region38: #{tpu_custom_call.1} parent=5 // pred_check_branch
        %217 = sbr.rel (%p214) target = $region40
      $region39: #{tpu_custom_call.1} parent=5 // pred_region
        %s218 = ssub.s32 %s14, 1
        %p219 = pneg %p35
        %p220 = pneg %p32
        %p221 = pneg %p56
        %p222 = pneg %p53
        %s223 = smul.u32 18, %s19
        %p224 = scmp.lt.s32.totalorder %s223, 35
        %s225 = scalar_select %p224, %s223, 35
        %s226 = smul.addr %s225, 8
        %s227 = scalar_lea.vmem %s2, %s226
        %p228 = pneg %p82
        %p229 = pneg %p79
        %s230 = smul.u32 18, %s19
        %p231 = scmp.lt.s32.totalorder %s230, 35
        %s232 = scalar_select %p231, %s230, 35
        %s233 = smul.addr %s232, 8
        %s234 = scalar_lea.vmem %s3, %s233
        %p235 = pneg %p108
        %p236 = pneg %p105
        %s237 = smul.u32 18, %s19
        %p238 = scmp.lt.s32.totalorder %s237, 35
        %s239 = scalar_select %p238, %s237, 35
        %s240 = smul.addr %s239, 8
        %s241 = scalar_lea.vmem %s4, %s240
        %p242 = pneg %p134
        %p243 = pneg %p131
        %p244 = pneg %p160
        %p245 = pneg %p157
        %s246 = sand.u32 %s147, 1
        %s247 = scalar_lea.sflag [#allocation3], %s246
        %s248 = sand.u32 %s147, 1
        %s249 = smul.addr %s248, 1008
        %s250 = scalar_lea.vmem [#allocation2], %s249
        %s251 = smul.u32 18, %s19
        %p252 = scmp.lt.s32.totalorder %s251, 35
        %s253 = scalar_select %p252, %s251, 35
        %s254 = smul.addr %s253, 8
        %s255 = scalar_lea.vmem %s2, %s254
        %s256 = smul.u32 18, %s19
        %s257 = smul.u32 18, %s19
        %p258 = scmp.lt.s32.totalorder %s257, 35
        %s259 = scalar_select %p258, %s257, 35
        %s260 = smul.addr %s259, 8
        %s261 = scalar_lea.vmem %s3, %s260
        %s262 = smul.u32 18, %s19
        %s263 = smul.u32 18, %s19
        %p264 = scmp.lt.s32.totalorder %s263, 35
        %s265 = scalar_select %p264, %s263, 35
        %s266 = smul.addr %s265, 8
        %s267 = scalar_lea.vmem %s4, %s266
        %s268 = smul.u32 18, %s19
        %s269 = smul.u32 18, %s19
        %v270 = vld [vmem:[%s0] sm:$0xff]
        %v271 = vld [vmem:[%s0 + $0x8] sm:$0xff]
        %v272 = vld [vmem:[%s0 + $0x10] sm:$0xff]
        %v273 = vld [vmem:[%s0 + $0x18] sm:$0xff]
        %v274 = vld [vmem:[%s0 + $0x20] sm:$0xff]
        %v275 = vld [vmem:[%s0 + $0x28] sm:$0xff]
        %v276 = vld [vmem:[%s0 + $0x30] sm:$0xff]
        %v277 = vld [vmem:[%s0 + $0x38] sm:$0xff]
        %v278 = vld [vmem:[%s0 + $0x40] sm:$0xff]
        %v279 = vld [vmem:[%s0 + $0x48] sm:$0xff]
        %v280 = vld [vmem:[%s0 + $0x50] sm:$0xff]
        %v281 = vld [vmem:[%s0 + $0x58] sm:$0xff]
        %v282 = vld [vmem:[%s0 + $0x60] sm:$0xff]
        %v283 = vld [vmem:[%s0 + $0x68] sm:$0xff]
        %v284 = vld [vmem:[%s0 + $0x70] sm:$0xff]
        %v285 = vld [vmem:[%s0 + $0x78] sm:$0xff]
        %v286 = vld [vmem:[%s0 + $0x80] sm:$0xff]
        %v287 = vld [vmem:[%s0 + $0x88] sm:$0xff]
        %v288 = vld [vmem:[%s0 + $0x90] sm:$0xff]
        %v289 = vld [vmem:[%s0 + $0x98] sm:$0xff]
        %v290 = vld [vmem:[%s0 + $0xa0] sm:$0xff]
        %v291 = vld [vmem:[%s0 + $0xa8] sm:$0xff]
        %v292 = vld [vmem:[%s0 + $0xb0] sm:$0xff]
        %v293 = vld [vmem:[%s0 + $0xb8] sm:$0xff]
        %v294 = vld [vmem:[%s0 + $0xc0] sm:$0xff]
        %v295 = vld [vmem:[%s0 + $0xc8] sm:$0xff]
        %v296 = vld [vmem:[%s0 + $0xd0] sm:$0xff]
        %v297 = vld [vmem:[%s0 + $0xd8] sm:$0xff]
        %v298 = vld [vmem:[%s0 + $0xe0] sm:$0xff]
        %v299 = vld [vmem:[%s0 + $0xe8] sm:$0xff]
        %v300 = vld [vmem:[%s0 + $0xf0] sm:$0xff]
        %v301 = vld [vmem:[%s0 + $0xf8] sm:$0xff]
        %v302 = vld [vmem:[%s0 + $0x100] sm:$0xff]
        %v303 = vld [vmem:[%s0 + $0x108] sm:$0xff]
        %v304 = vld [vmem:[%s0 + $0x110] sm:$0xff]
        %v305 = vld [vmem:[%s0 + $0x118] sm:$0xff]
        %v306 = vld [vmem:[%s0 + $0x120] sm:$0xff]
        %v307 = vld [vmem:[%s0 + $0x128] sm:$0xff]
        %v308 = vld [vmem:[%s0 + $0x130] sm:$0xff]
        %v309 = vld [vmem:[%s0 + $0x138] sm:$0xff]
        %v310 = vld [vmem:[%s0 + $0x140] sm:$0xff]
        %v311 = vld [vmem:[%s0 + $0x148] sm:$0xff]
        %v312 = vld [vmem:[%s1] sm:$0xff]
        %v313 = vld [vmem:[%s1 + $0x8] sm:$0xff]
        %v314 = vld [vmem:[%s1 + $0x10] sm:$0xff]
        %v315 = vld [vmem:[%s1 + $0x18] sm:$0xff]
        %v316 = vld [vmem:[%s1 + $0x20] sm:$0xff]
        %v317 = vld [vmem:[%s1 + $0x28] sm:$0xff]
        %v318 = vld [vmem:[%s1 + $0x30] sm:$0xff]
        %v319 = vld [vmem:[%s1 + $0x38] sm:$0xff]
        %v320 = vld [vmem:[%s1 + $0x40] sm:$0xff]
        %v321 = vld [vmem:[%s1 + $0x48] sm:$0xff]
        %v322 = vld [vmem:[%s1 + $0x50] sm:$0xff]
        %v323 = vld [vmem:[%s1 + $0x58] sm:$0xff]
        %v324 = vld [vmem:[%s1 + $0x60] sm:$0xff]
        %v325 = vld [vmem:[%s1 + $0x68] sm:$0xff]
        %v326 = vld [vmem:[%s1 + $0x70] sm:$0xff]
        %v327 = vld [vmem:[%s1 + $0x78] sm:$0xff]
        %v328 = vld [vmem:[%s1 + $0x80] sm:$0xff]
        %v329 = vld [vmem:[%s1 + $0x88] sm:$0xff]
        %v330 = vld [vmem:[%s1 + $0x90] sm:$0xff]
        %v331 = vld [vmem:[%s1 + $0x98] sm:$0xff]
        %v332 = vld [vmem:[%s1 + $0xa0] sm:$0xff]
        %v333 = vld [vmem:[%s1 + $0xa8] sm:$0xff]
        %v334 = vld [vmem:[%s1 + $0xb0] sm:$0xff]
        %v335 = vld [vmem:[%s1 + $0xb8] sm:$0xff]
        %v336 = vld [vmem:[%s1 + $0xc0] sm:$0xff]
        %v337 = vld [vmem:[%s1 + $0xc8] sm:$0xff]
        %v338 = vld [vmem:[%s1 + $0xd0] sm:$0xff]
        %v339 = vld [vmem:[%s1 + $0xd8] sm:$0xff]
        %v340 = vld [vmem:[%s1 + $0xe0] sm:$0xff]
        %v341 = vld [vmem:[%s1 + $0xe8] sm:$0xff]
        %v342 = vld [vmem:[%s1 + $0xf0] sm:$0xff]
        %v343 = vld [vmem:[%s1 + $0xf8] sm:$0xff]
        %v344 = vld [vmem:[%s1 + $0x100] sm:$0xff]
        %v345 = vld [vmem:[%s1 + $0x108] sm:$0xff]
        %v346 = vld [vmem:[%s1 + $0x110] sm:$0xff]
        %v347 = vld [vmem:[%s1 + $0x118] sm:$0xff]
        %v348 = vld [vmem:[%s1 + $0x120] sm:$0xff]
        %v349 = vld [vmem:[%s1 + $0x128] sm:$0xff]
        %v350 = vld [vmem:[%s1 + $0x130] sm:$0xff]
        %v351 = vld [vmem:[%s1 + $0x138] sm:$0xff]
        %v352 = vld [vmem:[%s1 + $0x140] sm:$0xff]
        %v353 = vld [vmem:[%s1 + $0x148] sm:$0xff]
        %v354 = vadd.f32 %v270, %v312
        %v355 = vadd.f32 %v271, %v313
        %v356 = vadd.f32 %v272, %v314
        %v357 = vadd.f32 %v273, %v315
        %v358 = vadd.f32 %v274, %v316
        %v359 = vadd.f32 %v275, %v317
        %v360 = vadd.f32 %v276, %v318
        %v361 = vadd.f32 %v277, %v319
        %v362 = vadd.f32 %v278, %v320
        %v363 = vadd.f32 %v279, %v321
        %v364 = vadd.f32 %v280, %v322
        %v365 = vadd.f32 %v281, %v323
        %v366 = vadd.f32 %v282, %v324
        %v367 = vadd.f32 %v283, %v325
        %v368 = vadd.f32 %v284, %v326
        %v369 = vadd.f32 %v285, %v327
        %v370 = vadd.f32 %v286, %v328
        %v371 = vadd.f32 %v287, %v329
        %v372 = vadd.f32 %v288, %v330
        %v373 = vadd.f32 %v289, %v331
        %v374 = vadd.f32 %v290, %v332
        %v375 = vadd.f32 %v291, %v333
        %v376 = vadd.f32 %v292, %v334
        %v377 = vadd.f32 %v293, %v335
        %v378 = vadd.f32 %v294, %v336
        %v379 = vadd.f32 %v295, %v337
        %v380 = vadd.f32 %v296, %v338
        %v381 = vadd.f32 %v297, %v339
        %v382 = vadd.f32 %v298, %v340
        %v383 = vadd.f32 %v299, %v341
        %v384 = vadd.f32 %v300, %v342
        %v385 = vadd.f32 %v301, %v343
        %v386 = vadd.f32 %v302, %v344
        %v387 = vadd.f32 %v303, %v345
        %v388 = vadd.f32 %v304, %v346
        %v389 = vadd.f32 %v305, %v347
        %v390 = vadd.f32 %v306, %v348
        %v391 = vadd.f32 %v307, %v349
        %v392 = vadd.f32 %v308, %v350
        %v393 = vadd.f32 %v309, %v351
        %v394 = vadd.f32 %v310, %v352
        %v395 = vadd.f32 %v311, %v353
        %v396 = vld [vmem:[%s255] sm:$0xff]
        %v397 = vld [vmem:[%s255 + $0x8] sm:$0xff]
        %v398 = vld [vmem:[%s255 + $0x10] sm:$0xff]
        %v399 = vld [vmem:[%s255 + $0x18] sm:$0xff]
        %v400 = vld [vmem:[%s255 + $0x20] sm:$0xff]
        %v401 = vld [vmem:[%s255 + $0x28] sm:$0xff]
        %v402 = vld [vmem:[%s255 + $0x30] sm:$0xff]
        %v403 = vld [vmem:[%s255 + $0x38] sm:$0xff]
        %v404 = vld [vmem:[%s255 + $0x40] sm:$0xff]
        %v405 = vld [vmem:[%s255 + $0x48] sm:$0xff]
        %v406 = vld [vmem:[%s255 + $0x50] sm:$0xff]
        %v407 = vld [vmem:[%s255 + $0x58] sm:$0xff]
        %v408 = vld [vmem:[%s255 + $0x60] sm:$0xff]
        %v409 = vld [vmem:[%s255 + $0x68] sm:$0xff]
        %v410 = vld [vmem:[%s255 + $0x70] sm:$0xff]
        %v411 = vld [vmem:[%s255 + $0x78] sm:$0xff]
        %v412 = vld [vmem:[%s255 + $0x80] sm:$0xff]
        %v413 = vld [vmem:[%s255 + $0x88] sm:$0xff]
        %vm414 = vcmask 392192
        %v416 = vsel %vm414, %v396, 0
        %v419 = vsel %vm414, %v397, 0
        %v422 = vsel %vm414, %v398, 0
        %v425 = vsel %vm414, %v399, 0
        %v428 = vsel %vm414, %v400, 0
        %v431 = vsel %vm414, %v401, 0
        %v434 = vsel %vm414, %v402, 0
        %v437 = vsel %vm414, %v403, 0
        %v440 = vsel %vm414, %v404, 0
        %v443 = vsel %vm414, %v405, 0
        %v446 = vsel %vm414, %v406, 0
        %v449 = vsel %vm414, %v407, 0
        %v452 = vsel %vm414, %v408, 0
        %v455 = vsel %vm414, %v409, 0
        %v458 = vsel %vm414, %v410, 0
        %v461 = vsel %vm414, %v411, 0
        %v464 = vsel %vm414, %v412, 0
        %v467 = vsel %vm414, %v413, 0
        %469 = vmatprep.subr.mxu0 0.0
        %470 = vmatpush1.msra.mxu0 0.0
        %471 = vmatprep.subr.mxu0 0.0
        %472 = vmatpush1.msra.mxu0 0.0
        %473 = vmatprep.subr.mxu0 0.0
        %474 = vmatpush1.msra.mxu0 0.0
        %475 = vmatprep.subr.mxu0 0.0
        %476 = vmatpush1.msra.mxu0 0.0
        %477 = vmatprep.subr.mxu0 0.0
        %478 = vmatpush1.msra.mxu0 0.0
        %479 = vmatprep.subr.mxu0 0.0
        %480 = vmatpush1.msra.mxu0 0.0
        %481 = vmatprep.subr.mxu0 0.0
        %482 = vmatpush1.msra.mxu0 0.0
        %483 = vmatprep.subr.mxu0 0.0
        %484 = vmatpush1.msra.mxu0 0.0
        %485 = vmatprep.subr.mxu0 0.0
        %486 = vmatpush1.msra.mxu0 0.0
        %487 = vmatprep.subr.mxu0 0.0
        %488 = vmatpush1.msra.mxu0 0.0
        %489 = vmatprep.subr.mxu0 %v390
        %490 = vmatpush1.msra.mxu0 %v389
        %491 = vmatprep.subr.mxu0 %v383
        %492 = vmatpush1.msra.mxu0 %v382
        %493 = vmatprep.subr.mxu0 %v376
        %494 = vmatpush1.msra.mxu0 %v375
        %495 = vmatprep.subr.mxu0 %v369
        %496 = vmatpush1.msra.mxu0 %v368
        %497 = vmatprep.subr.mxu0 %v362
        %498 = vmatpush1.msra.mxu0 %v361
        %499 = vmatprep.subr.mxu0 %v355
        %500 = vmatpush1.msra.mxu0 %v354
        %501 = vmatprep.subr.mxu0 0.0
        %502 = vmatpush2.msra.mxu0 0.0
        %503 = vmatprep.subr.mxu0 0.0
        %504 = vmatpush2.msra.mxu0 0.0
        %505 = vmatprep.subr.mxu0 0.0
        %506 = vmatpush2.msra.mxu0 0.0
        %507 = vmatprep.subr.mxu0 0.0
        %508 = vmatpush2.msra.mxu0 0.0
        %509 = vmatprep.subr.mxu0 0.0
        %510 = vmatpush2.msra.mxu0 0.0
        %511 = vmatprep.subr.mxu0 0.0
        %512 = vmatpush2.msra.mxu0 0.0
        %513 = vmatprep.subr.mxu0 0.0
        %514 = vmatpush2.msra.mxu0 0.0
        %515 = vmatprep.subr.mxu0 0.0
        %516 = vmatpush2.msra.mxu0 0.0
        %517 = vmatprep.subr.mxu0 0.0
        %518 = vmatpush2.msra.mxu0 0.0
        %519 = vmatprep.subr.mxu0 0.0
        %520 = vmatpush2.msra.mxu0 0.0
        %521 = vmatprep.subr.mxu0 0.0
        %522 = vmatpush2.msra.mxu0 0.0
        %523 = vmatprep.subr.mxu0 0.0
        %524 = vmatpush2.msra.mxu0 0.0
        %525 = vmatprep.subr.mxu0 0.0
        %526 = vmatpush2.msra.mxu0 0.0
        %527 = vmatprep.subr.mxu0 0.0
        %528 = vmatpush2.msra.mxu0 0.0
        %529 = vmatprep.subr.mxu0 0.0
        %530 = vmatpush2.msra.mxu0 0.0
        %531 = vmatprep.subr.mxu0 0.0
        %532 = vmatpush2.msra.mxu0 0.0
        %533 = vmatprep.mubr.f32.mxu0 0.0
        %534 = vmatmul.mubr.f32.gmra.mxu0 %v416
        %v535 = vpop.f32.mrf.mxu0
        %v536 = vadd.f32 0.0, %v535
        %v537 = vpop.f32.mrf.mxu0
        %v538 = vadd.f32 0.0, %v537
        %539 = vmatprep.mubr.f32.mxu0 0.0
        %540 = vmatmul.mubr.f32.gmra.mxu0 %v419
        %v541 = vpop.f32.mrf.mxu0
        %v542 = vadd.f32 0.0, %v541
        %v543 = vpop.f32.mrf.mxu0
        %v544 = vadd.f32 0.0, %v543
        %545 = vmatprep.mubr.f32.mxu0 0.0
        %546 = vmatmul.mubr.f32.gmra.mxu0 %v422
        %v547 = vpop.f32.mrf.mxu0
        %v548 = vadd.f32 0.0, %v547
        %v549 = vpop.f32.mrf.mxu0
        %v550 = vadd.f32 0.0, %v549
        %551 = vmatprep.mubr.f32.mxu0 0.0
        %552 = vmatmul.mubr.f32.gmra.mxu0 %v425
        %v553 = vpop.f32.mrf.mxu0
        %v554 = vadd.f32 0.0, %v553
        %v555 = vpop.f32.mrf.mxu0
        %v556 = vadd.f32 0.0, %v555
        %557 = vmatprep.mubr.f32.mxu0 0.0
        %558 = vmatmul.mubr.f32.gmra.mxu0 %v428
        %v559 = vpop.f32.mrf.mxu0
        %v560 = vadd.f32 0.0, %v559
        %v561 = vpop.f32.mrf.mxu0
        %v562 = vadd.f32 0.0, %v561
        %563 = vmatprep.mubr.f32.mxu0 0.0
        %564 = vmatmul.mubr.f32.gmra.mxu0 %v431
        %v565 = vpop.f32.mrf.mxu0
        %v566 = vadd.f32 0.0, %v565
        %v567 = vpop.f32.mrf.mxu0
        %v568 = vadd.f32 0.0, %v567
        %569 = vmatprep.mubr.f32.mxu0 0.0
        %570 = vmatmul.mubr.f32.gmra.mxu0 %v434
        %v571 = vpop.f32.mrf.mxu0
        %v572 = vadd.f32 0.0, %v571
        %v573 = vpop.f32.mrf.mxu0
        %v574 = vadd.f32 0.0, %v573
        %575 = vmatprep.mubr.f32.mxu0 0.0
        %576 = vmatmul.mubr.f32.gmra.mxu0 %v437
        %v577 = vpop.f32.mrf.mxu0
        %v578 = vadd.f32 0.0, %v577
        %v579 = vpop.f32.mrf.mxu0
        %v580 = vadd.f32 0.0, %v579
        %581 = vmatprep.mubr.f32.mxu0 0.0
        %582 = vmatmul.mubr.f32.gmra.mxu0 %v440
        %v583 = vpop.f32.mrf.mxu0
        %v584 = vadd.f32 0.0, %v583
        %v585 = vpop.f32.mrf.mxu0
        %v586 = vadd.f32 0.0, %v585
        %587 = vmatprep.mubr.f32.mxu0 0.0
        %588 = vmatmul.mubr.f32.gmra.mxu0 %v443
        %v589 = vpop.f32.mrf.mxu0
        %v590 = vadd.f32 0.0, %v589
        %v591 = vpop.f32.mrf.mxu0
        %v592 = vadd.f32 0.0, %v591
        %593 = vmatprep.mubr.f32.mxu0 0.0
        %594 = vmatmul.mubr.f32.gmra.mxu0 %v446
        %v595 = vpop.f32.mrf.mxu0
        %v596 = vadd.f32 0.0, %v595
        %v597 = vpop.f32.mrf.mxu0
        %v598 = vadd.f32 0.0, %v597
        %599 = vmatprep.mubr.f32.mxu0 0.0
        %600 = vmatmul.mubr.f32.gmra.mxu0 %v449
        %v601 = vpop.f32.mrf.mxu0
        %v602 = vadd.f32 0.0, %v601
        %v603 = vpop.f32.mrf.mxu0
        %v604 = vadd.f32 0.0, %v603
        %605 = vmatprep.mubr.f32.mxu0 0.0
        %606 = vmatmul.mubr.f32.gmra.mxu0 %v452
        %v607 = vpop.f32.mrf.mxu0
        %v608 = vadd.f32 0.0, %v607
        %v609 = vpop.f32.mrf.mxu0
        %v610 = vadd.f32 0.0, %v609
        %611 = vmatprep.mubr.f32.mxu0 0.0
        %612 = vmatmul.mubr.f32.gmra.mxu0 %v455
        %v613 = vpop.f32.mrf.mxu0
        %v614 = vadd.f32 0.0, %v613
        %v615 = vpop.f32.mrf.mxu0
        %v616 = vadd.f32 0.0, %v615
        %617 = vmatprep.mubr.f32.mxu0 0.0
        %618 = vmatmul.mubr.f32.gmra.mxu0 %v458
        %v619 = vpop.f32.mrf.mxu0
        %v620 = vadd.f32 0.0, %v619
        %v621 = vpop.f32.mrf.mxu0
        %v622 = vadd.f32 0.0, %v621
        %623 = vmatprep.mubr.f32.mxu0 0.0
        %624 = vmatmul.mubr.f32.gmra.mxu0 %v461
        %v625 = vpop.f32.mrf.mxu0
        %v626 = vadd.f32 0.0, %v625
        %v627 = vpop.f32.mrf.mxu0
        %v628 = vadd.f32 0.0, %v627
        %629 = vmatprep.mubr.f32.mxu0 0.0
        %630 = vmatmul.mubr.f32.gmra.mxu0 %v464
        %v631 = vpop.f32.mrf.mxu0
        %v632 = vadd.f32 0.0, %v631
        %v633 = vpop.f32.mrf.mxu0
        %v634 = vadd.f32 0.0, %v633
        %635 = vmatprep.mubr.f32.mxu0 0.0
        %636 = vmatmul.mubr.f32.gmra.mxu0 %v467
        %v637 = vpop.f32.mrf.mxu0
        %v638 = vadd.f32 0.0, %v637
        %v639 = vpop.f32.mrf.mxu0
        %v640 = vadd.f32 0.0, %v639
        %641 = vdwg.mxu0
        %642 = vmatprep.subr.mxu0 0.0
        %643 = vmatpush1.msra.mxu0 0.0
        %644 = vmatprep.subr.mxu0 0.0
        %645 = vmatpush1.msra.mxu0 0.0
        %646 = vmatprep.subr.mxu0 0.0
        %647 = vmatpush1.msra.mxu0 0.0
        %648 = vmatprep.subr.mxu0 0.0
        %649 = vmatpush1.msra.mxu0 0.0
        %650 = vmatprep.subr.mxu0 0.0
        %651 = vmatpush1.msra.mxu0 0.0
        %652 = vmatprep.subr.mxu0 0.0
        %653 = vmatpush1.msra.mxu0 0.0
        %654 = vmatprep.subr.mxu0 0.0
        %655 = vmatpush1.msra.mxu0 0.0
        %656 = vmatprep.subr.mxu0 0.0
        %657 = vmatpush1.msra.mxu0 0.0
        %658 = vmatprep.subr.mxu0 0.0
        %659 = vmatpush1.msra.mxu0 0.0
        %660 = vmatprep.subr.mxu0 0.0
        %661 = vmatpush1.msra.mxu0 0.0
        %662 = vmatprep.subr.mxu0 %v392
        %663 = vmatpush1.msra.mxu0 %v391
        %664 = vmatprep.subr.mxu0 %v385
        %665 = vmatpush1.msra.mxu0 %v384
        %666 = vmatprep.subr.mxu0 %v378
        %667 = vmatpush1.msra.mxu0 %v377
        %668 = vmatprep.subr.mxu0 %v371
        %669 = vmatpush1.msra.mxu0 %v370
        %670 = vmatprep.subr.mxu0 %v364
        %671 = vmatpush1.msra.mxu0 %v363
        %672 = vmatprep.subr.mxu0 %v357
        %673 = vmatpush1.msra.mxu0 %v356
        %674 = vmatprep.subr.mxu0 0.0
        %675 = vmatpush2.msra.mxu0 0.0
        %676 = vmatprep.subr.mxu0 0.0
        %677 = vmatpush2.msra.mxu0 0.0
        %678 = vmatprep.subr.mxu0 0.0
        %679 = vmatpush2.msra.mxu0 0.0
        %680 = vmatprep.subr.mxu0 0.0
        %681 = vmatpush2.msra.mxu0 0.0
        %682 = vmatprep.subr.mxu0 0.0
        %683 = vmatpush2.msra.mxu0 0.0
        %684 = vmatprep.subr.mxu0 0.0
        %685 = vmatpush2.msra.mxu0 0.0
        %686 = vmatprep.subr.mxu0 0.0
        %687 = vmatpush2.msra.mxu0 0.0
        %688 = vmatprep.subr.mxu0 0.0
        %689 = vmatpush2.msra.mxu0 0.0
        %690 = vmatprep.subr.mxu0 0.0
        %691 = vmatpush2.msra.mxu0 0.0
        %692 = vmatprep.subr.mxu0 0.0
        %693 = vmatpush2.msra.mxu0 0.0
        %694 = vmatprep.subr.mxu0 0.0
        %695 = vmatpush2.msra.mxu0 0.0
        %696 = vmatprep.subr.mxu0 0.0
        %697 = vmatpush2.msra.mxu0 0.0
        %698 = vmatprep.subr.mxu0 0.0
        %699 = vmatpush2.msra.mxu0 0.0
        %700 = vmatprep.subr.mxu0 0.0
        %701 = vmatpush2.msra.mxu0 0.0
        %702 = vmatprep.subr.mxu0 0.0
        %703 = vmatpush2.msra.mxu0 0.0
        %704 = vmatprep.subr.mxu0 0.0
        %705 = vmatpush2.msra.mxu0 0.0
        %706 = vmatprep.mubr.f32.mxu0 0.0
        %707 = vmatmul.mubr.f32.gmra.mxu0 %v416
        %v708 = vpop.f32.mrf.mxu0
        %v709 = vadd.f32 0.0, %v708
        %v710 = vpop.f32.mrf.mxu0
        %v711 = vadd.f32 0.0, %v710
        %712 = vmatprep.mubr.f32.mxu0 0.0
        %713 = vmatmul.mubr.f32.gmra.mxu0 %v419
        %v714 = vpop.f32.mrf.mxu0
        %v715 = vadd.f32 0.0, %v714
        %v716 = vpop.f32.mrf.mxu0
        %v717 = vadd.f32 0.0, %v716
        %718 = vmatprep.mubr.f32.mxu0 0.0
        %719 = vmatmul.mubr.f32.gmra.mxu0 %v422
        %v720 = vpop.f32.mrf.mxu0
        %v721 = vadd.f32 0.0, %v720
        %v722 = vpop.f32.mrf.mxu0
        %v723 = vadd.f32 0.0, %v722
        %724 = vmatprep.mubr.f32.mxu0 0.0
        %725 = vmatmul.mubr.f32.gmra.mxu0 %v425
        %v726 = vpop.f32.mrf.mxu0
        %v727 = vadd.f32 0.0, %v726
        %v728 = vpop.f32.mrf.mxu0
        %v729 = vadd.f32 0.0, %v728
        %730 = vmatprep.mubr.f32.mxu0 0.0
        %731 = vmatmul.mubr.f32.gmra.mxu0 %v428
        %v732 = vpop.f32.mrf.mxu0
        %v733 = vadd.f32 0.0, %v732
        %v734 = vpop.f32.mrf.mxu0
        %v735 = vadd.f32 0.0, %v734
        %736 = vmatprep.mubr.f32.mxu0 0.0
        %737 = vmatmul.mubr.f32.gmra.mxu0 %v431
        %v738 = vpop.f32.mrf.mxu0
        %v739 = vadd.f32 0.0, %v738
        %v740 = vpop.f32.mrf.mxu0
        %v741 = vadd.f32 0.0, %v740
        %742 = vmatprep.mubr.f32.mxu0 0.0
        %743 = vmatmul.mubr.f32.gmra.mxu0 %v434
        %v744 = vpop.f32.mrf.mxu0
        %v745 = vadd.f32 0.0, %v744
        %v746 = vpop.f32.mrf.mxu0
        %v747 = vadd.f32 0.0, %v746
        %748 = vmatprep.mubr.f32.mxu0 0.0
        %749 = vmatmul.mubr.f32.gmra.mxu0 %v437
        %v750 = vpop.f32.mrf.mxu0
        %v751 = vadd.f32 0.0, %v750
        %v752 = vpop.f32.mrf.mxu0
        %v753 = vadd.f32 0.0, %v752
        %754 = vmatprep.mubr.f32.mxu0 0.0
        %755 = vmatmul.mubr.f32.gmra.mxu0 %v440
        %v756 = vpop.f32.mrf.mxu0
        %v757 = vadd.f32 0.0, %v756
        %v758 = vpop.f32.mrf.mxu0
        %v759 = vadd.f32 0.0, %v758
        %760 = vmatprep.mubr.f32.mxu0 0.0
        %761 = vmatmul.mubr.f32.gmra.mxu0 %v443
        %v762 = vpop.f32.mrf.mxu0
        %v763 = vadd.f32 0.0, %v762
        %v764 = vpop.f32.mrf.mxu0
        %v765 = vadd.f32 0.0, %v764
        %766 = vmatprep.mubr.f32.mxu0 0.0
        %767 = vmatmul.mubr.f32.gmra.mxu0 %v446
        %v768 = vpop.f32.mrf.mxu0
        %v769 = vadd.f32 0.0, %v768
        %v770 = vpop.f32.mrf.mxu0
        %v771 = vadd.f32 0.0, %v770
        %772 = vmatprep.mubr.f32.mxu0 0.0
        %773 = vmatmul.mubr.f32.gmra.mxu0 %v449
        %v774 = vpop.f32.mrf.mxu0
        %v775 = vadd.f32 0.0, %v774
        %v776 = vpop.f32.mrf.mxu0
        %v777 = vadd.f32 0.0, %v776
        %778 = vmatprep.mubr.f32.mxu0 0.0
        %779 = vmatmul.mubr.f32.gmra.mxu0 %v452
        %v780 = vpop.f32.mrf.mxu0
        %v781 = vadd.f32 0.0, %v780
        %v782 = vpop.f32.mrf.mxu0
        %v783 = vadd.f32 0.0, %v782
        %784 = vmatprep.mubr.f32.mxu0 0.0
        %785 = vmatmul.mubr.f32.gmra.mxu0 %v455
        %v786 = vpop.f32.mrf.mxu0
        %v787 = vadd.f32 0.0, %v786
        %v788 = vpop.f32.mrf.mxu0
        %v789 = vadd.f32 0.0, %v788
        %790 = vmatprep.mubr.f32.mxu0 0.0
        %791 = vmatmul.mubr.f32.gmra.mxu0 %v458
        %v792 = vpop.f32.mrf.mxu0
        %v793 = vadd.f32 0.0, %v792
        %v794 = vpop.f32.mrf.mxu0
        %v795 = vadd.f32 0.0, %v794
        %796 = vmatprep.mubr.f32.mxu0 0.0
        %797 = vmatmul.mubr.f32.gmra.mxu0 %v461
        %v798 = vpop.f32.mrf.mxu0
        %v799 = vadd.f32 0.0, %v798
        %v800 = vpop.f32.mrf.mxu0
        %v801 = vadd.f32 0.0, %v800
        %802 = vmatprep.mubr.f32.mxu0 0.0
        %803 = vmatmul.mubr.f32.gmra.mxu0 %v464
        %v804 = vpop.f32.mrf.mxu0
        %v805 = vadd.f32 0.0, %v804
        %v806 = vpop.f32.mrf.mxu0
        %v807 = vadd.f32 0.0, %v806
        %808 = vmatprep.mubr.f32.mxu0 0.0
        %809 = vmatmul.mubr.f32.gmra.mxu0 %v467
        %v810 = vpop.f32.mrf.mxu0
        %v811 = vadd.f32 0.0, %v810
        %v812 = vpop.f32.mrf.mxu0
        %v813 = vadd.f32 0.0, %v812
        %814 = vdwg.mxu0
        %815 = vmatprep.subr.mxu0 0.0
        %816 = vmatpush1.msra.mxu0 0.0
        %817 = vmatprep.subr.mxu0 0.0
        %818 = vmatpush1.msra.mxu0 0.0
        %819 = vmatprep.subr.mxu0 0.0
        %820 = vmatpush1.msra.mxu0 0.0
        %821 = vmatprep.subr.mxu0 0.0
        %822 = vmatpush1.msra.mxu0 0.0
        %823 = vmatprep.subr.mxu0 0.0
        %824 = vmatpush1.msra.mxu0 0.0
        %825 = vmatprep.subr.mxu0 0.0
        %826 = vmatpush1.msra.mxu0 0.0
        %827 = vmatprep.subr.mxu0 0.0
        %828 = vmatpush1.msra.mxu0 0.0
        %829 = vmatprep.subr.mxu0 0.0
        %830 = vmatpush1.msra.mxu0 0.0
        %831 = vmatprep.subr.mxu0 0.0
        %832 = vmatpush1.msra.mxu0 0.0
        %833 = vmatprep.subr.mxu0 0.0
        %834 = vmatpush1.msra.mxu0 0.0
        %835 = vmatprep.subr.mxu0 %v394
        %836 = vmatpush1.msra.mxu0 %v393
        %837 = vmatprep.subr.mxu0 %v387
        %838 = vmatpush1.msra.mxu0 %v386
        %839 = vmatprep.subr.mxu0 %v380
        %840 = vmatpush1.msra.mxu0 %v379
        %841 = vmatprep.subr.mxu0 %v373
        %842 = vmatpush1.msra.mxu0 %v372
        %843 = vmatprep.subr.mxu0 %v366
        %844 = vmatpush1.msra.mxu0 %v365
        %845 = vmatprep.subr.mxu0 %v359
        %846 = vmatpush1.msra.mxu0 %v358
        %847 = vmatprep.subr.mxu0 0.0
        %848 = vmatpush2.msra.mxu0 0.0
        %849 = vmatprep.subr.mxu0 0.0
        %850 = vmatpush2.msra.mxu0 0.0
        %851 = vmatprep.subr.mxu0 0.0
        %852 = vmatpush2.msra.mxu0 0.0
        %853 = vmatprep.subr.mxu0 0.0
        %854 = vmatpush2.msra.mxu0 0.0
        %855 = vmatprep.subr.mxu0 0.0
        %856 = vmatpush2.msra.mxu0 0.0
        %857 = vmatprep.subr.mxu0 0.0
        %858 = vmatpush2.msra.mxu0 0.0
        %859 = vmatprep.subr.mxu0 0.0
        %860 = vmatpush2.msra.mxu0 0.0
        %861 = vmatprep.subr.mxu0 0.0
        %862 = vmatpush2.msra.mxu0 0.0
        %863 = vmatprep.subr.mxu0 0.0
        %864 = vmatpush2.msra.mxu0 0.0
        %865 = vmatprep.subr.mxu0 0.0
        %866 = vmatpush2.msra.mxu0 0.0
        %867 = vmatprep.subr.mxu0 0.0
        %868 = vmatpush2.msra.mxu0 0.0
        %869 = vmatprep.subr.mxu0 0.0
        %870 = vmatpush2.msra.mxu0 0.0
        %871 = vmatprep.subr.mxu0 0.0
        %872 = vmatpush2.msra.mxu0 0.0
        %873 = vmatprep.subr.mxu0 0.0
        %874 = vmatpush2.msra.mxu0 0.0
        %875 = vmatprep.subr.mxu0 0.0
        %876 = vmatpush2.msra.mxu0 0.0
        %877 = vmatprep.subr.mxu0 0.0
        %878 = vmatpush2.msra.mxu0 0.0
        %879 = vmatprep.mubr.f32.mxu0 0.0
        %880 = vmatmul.mubr.f32.gmra.mxu0 %v416
        %v881 = vpop.f32.mrf.mxu0
        %v882 = vadd.f32 0.0, %v881
        %v883 = vpop.f32.mrf.mxu0
        %v884 = vadd.f32 0.0, %v883
        %885 = vmatprep.mubr.f32.mxu0 0.0
        %886 = vmatmul.mubr.f32.gmra.mxu0 %v419
        %v887 = vpop.f32.mrf.mxu0
        %v888 = vadd.f32 0.0, %v887
        %v889 = vpop.f32.mrf.mxu0
        %v890 = vadd.f32 0.0, %v889
        %891 = vmatprep.mubr.f32.mxu0 0.0
        %892 = vmatmul.mubr.f32.gmra.mxu0 %v422
        %v893 = vpop.f32.mrf.mxu0
        %v894 = vadd.f32 0.0, %v893
        %v895 = vpop.f32.mrf.mxu0
        %v896 = vadd.f32 0.0, %v895
        %897 = vmatprep.mubr.f32.mxu0 0.0
        %898 = vmatmul.mubr.f32.gmra.mxu0 %v425
        %v899 = vpop.f32.mrf.mxu0
        %v900 = vadd.f32 0.0, %v899
        %v901 = vpop.f32.mrf.mxu0
        %v902 = vadd.f32 0.0, %v901
        %903 = vmatprep.mubr.f32.mxu0 0.0
        %904 = vmatmul.mubr.f32.gmra.mxu0 %v428
        %v905 = vpop.f32.mrf.mxu0
        %v906 = vadd.f32 0.0, %v905
        %v907 = vpop.f32.mrf.mxu0
        %v908 = vadd.f32 0.0, %v907
        %909 = vmatprep.mubr.f32.mxu0 0.0
        %910 = vmatmul.mubr.f32.gmra.mxu0 %v431
        %v911 = vpop.f32.mrf.mxu0
        %v912 = vadd.f32 0.0, %v911
        %v913 = vpop.f32.mrf.mxu0
        %v914 = vadd.f32 0.0, %v913
        %915 = vmatprep.mubr.f32.mxu0 0.0
        %916 = vmatmul.mubr.f32.gmra.mxu0 %v434
        %v917 = vpop.f32.mrf.mxu0
        %v918 = vadd.f32 0.0, %v917
        %v919 = vpop.f32.mrf.mxu0
        %v920 = vadd.f32 0.0, %v919
        %921 = vmatprep.mubr.f32.mxu0 0.0
        %922 = vmatmul.mubr.f32.gmra.mxu0 %v437
        %v923 = vpop.f32.mrf.mxu0
        %v924 = vadd.f32 0.0, %v923
        %v925 = vpop.f32.mrf.mxu0
        %v926 = vadd.f32 0.0, %v925
        %927 = vmatprep.mubr.f32.mxu0 0.0
        %928 = vmatmul.mubr.f32.gmra.mxu0 %v440
        %v929 = vpop.f32.mrf.mxu0
        %v930 = vadd.f32 0.0, %v929
        %v931 = vpop.f32.mrf.mxu0
        %v932 = vadd.f32 0.0, %v931
        %933 = vmatprep.mubr.f32.mxu0 0.0
        %934 = vmatmul.mubr.f32.gmra.mxu0 %v443
        %v935 = vpop.f32.mrf.mxu0
        %v936 = vadd.f32 0.0, %v935
        %v937 = vpop.f32.mrf.mxu0
        %v938 = vadd.f32 0.0, %v937
        %939 = vmatprep.mubr.f32.mxu0 0.0
        %940 = vmatmul.mubr.f32.gmra.mxu0 %v446
        %v941 = vpop.f32.mrf.mxu0
        %v942 = vadd.f32 0.0, %v941
        %v943 = vpop.f32.mrf.mxu0
        %v944 = vadd.f32 0.0, %v943
        %945 = vmatprep.mubr.f32.mxu0 0.0
        %946 = vmatmul.mubr.f32.gmra.mxu0 %v449
        %v947 = vpop.f32.mrf.mxu0
        %v948 = vadd.f32 0.0, %v947
        %v949 = vpop.f32.mrf.mxu0
        %v950 = vadd.f32 0.0, %v949
        %951 = vmatprep.mubr.f32.mxu0 0.0
        %952 = vmatmul.mubr.f32.gmra.mxu0 %v452
        %v953 = vpop.f32.mrf.mxu0
        %v954 = vadd.f32 0.0, %v953
        %v955 = vpop.f32.mrf.mxu0
        %v956 = vadd.f32 0.0, %v955
        %957 = vmatprep.mubr.f32.mxu0 0.0
        %958 = vmatmul.mubr.f32.gmra.mxu0 %v455
        %v959 = vpop.f32.mrf.mxu0
        %v960 = vadd.f32 0.0, %v959
        %v961 = vpop.f32.mrf.mxu0
        %v962 = vadd.f32 0.0, %v961
        %963 = vmatprep.mubr.f32.mxu0 0.0
        %964 = vmatmul.mubr.f32.gmra.mxu0 %v458
        %v965 = vpop.f32.mrf.mxu0
        %v966 = vadd.f32 0.0, %v965
        %v967 = vpop.f32.mrf.mxu0
        %v968 = vadd.f32 0.0, %v967
        %969 = vmatprep.mubr.f32.mxu0 0.0
        %970 = vmatmul.mubr.f32.gmra.mxu0 %v461
        %v971 = vpop.f32.mrf.mxu0
        %v972 = vadd.f32 0.0, %v971
        %v973 = vpop.f32.mrf.mxu0
        %v974 = vadd.f32 0.0, %v973
        %975 = vmatprep.mubr.f32.mxu0 0.0
        %976 = vmatmul.mubr.f32.gmra.mxu0 %v464
        %v977 = vpop.f32.mrf.mxu0
        %v978 = vadd.f32 0.0, %v977
        %v979 = vpop.f32.mrf.mxu0
        %v980 = vadd.f32 0.0, %v979
        %981 = vmatprep.mubr.f32.mxu0 0.0
        %982 = vmatmul.mubr.f32.gmra.mxu0 %v467
        %v983 = vpop.f32.mrf.mxu0
        %v984 = vadd.f32 0.0, %v983
        %v985 = vpop.f32.mrf.mxu0
        %v986 = vadd.f32 0.0, %v985
        %987 = vdwg.mxu0
        %988 = vmatprep.subr.mxu0 0.0
        %989 = vmatpush1.msra.mxu0 0.0
        %990 = vmatprep.subr.mxu0 0.0
        %991 = vmatpush1.msra.mxu0 0.0
        %992 = vmatprep.subr.mxu0 0.0
        %993 = vmatpush1.msra.mxu0 0.0
        %994 = vmatprep.subr.mxu0 0.0
        %995 = vmatpush1.msra.mxu0 0.0
        %996 = vmatprep.subr.mxu0 0.0
        %997 = vmatpush1.msra.mxu0 0.0
        %998 = vmatprep.subr.mxu0 0.0
        %999 = vmatpush1.msra.mxu0 0.0
        %1000 = vmatprep.subr.mxu0 0.0
        %1001 = vmatpush1.msra.mxu0 0.0
        %1002 = vmatprep.subr.mxu0 0.0
        %1003 = vmatpush1.msra.mxu0 0.0
        %1004 = vmatprep.subr.mxu0 0.0
        %1005 = vmatpush1.msra.mxu0 0.0
        %1006 = vmatprep.subr.mxu0 0.0
        %1007 = vmatpush1.msra.mxu0 0.0
        %1008 = vmatprep.subr.mxu0 0.0
        %1009 = vmatpush1.msra.mxu0 %v395
        %1010 = vmatprep.subr.mxu0 0.0
        %1011 = vmatpush1.msra.mxu0 %v388
        %1012 = vmatprep.subr.mxu0 0.0
        %1013 = vmatpush1.msra.mxu0 %v381
        %1014 = vmatprep.subr.mxu0 0.0
        %1015 = vmatpush1.msra.mxu0 %v374
        %1016 = vmatprep.subr.mxu0 0.0
        %1017 = vmatpush1.msra.mxu0 %v367
        %1018 = vmatprep.subr.mxu0 0.0
        %1019 = vmatpush1.msra.mxu0 %v360
        %1020 = vmatprep.subr.mxu0 0.0
        %1021 = vmatpush2.msra.mxu0 0.0
        %1022 = vmatprep.subr.mxu0 0.0
        %1023 = vmatpush2.msra.mxu0 0.0
        %1024 = vmatprep.subr.mxu0 0.0
        %1025 = vmatpush2.msra.mxu0 0.0
        %1026 = vmatprep.subr.mxu0 0.0
        %1027 = vmatpush2.msra.mxu0 0.0
        %1028 = vmatprep.subr.mxu0 0.0
        %1029 = vmatpush2.msra.mxu0 0.0
        %1030 = vmatprep.subr.mxu0 0.0
        %1031 = vmatpush2.msra.mxu0 0.0
        %1032 = vmatprep.subr.mxu0 0.0
        %1033 = vmatpush2.msra.mxu0 0.0
        %1034 = vmatprep.subr.mxu0 0.0
        %1035 = vmatpush2.msra.mxu0 0.0
        %1036 = vmatprep.subr.mxu0 0.0
        %1037 = vmatpush2.msra.mxu0 0.0
        %1038 = vmatprep.subr.mxu0 0.0
        %1039 = vmatpush2.msra.mxu0 0.0
        %1040 = vmatprep.subr.mxu0 0.0
        %1041 = vmatpush2.msra.mxu0 0.0
        %1042 = vmatprep.subr.mxu0 0.0
        %1043 = vmatpush2.msra.mxu0 0.0
        %1044 = vmatprep.subr.mxu0 0.0
        %1045 = vmatpush2.msra.mxu0 0.0
        %1046 = vmatprep.subr.mxu0 0.0
        %1047 = vmatpush2.msra.mxu0 0.0
        %1048 = vmatprep.subr.mxu0 0.0
        %1049 = vmatpush2.msra.mxu0 0.0
        %1050 = vmatprep.subr.mxu0 0.0
        %1051 = vmatpush2.msra.mxu0 0.0
        %1052 = vmatprep.mubr.f32.mxu0 0.0
        %1053 = vmatmul.mubr.f32.gmra.mxu0 %v416
        %v1054 = vpop.f32.mrf.mxu0
        %v1055 = vadd.f32 0.0, %v1054
        %v1056 = vpop.f32.mrf.mxu0
        %1057 = vmatprep.mubr.f32.mxu0 0.0
        %1058 = vmatmul.mubr.f32.gmra.mxu0 %v419
        %v1059 = vpop.f32.mrf.mxu0
        %v1060 = vadd.f32 0.0, %v1059
        %v1061 = vpop.f32.mrf.mxu0
        %1062 = vmatprep.mubr.f32.mxu0 0.0
        %1063 = vmatmul.mubr.f32.gmra.mxu0 %v422
        %v1064 = vpop.f32.mrf.mxu0
        %v1065 = vadd.f32 0.0, %v1064
        %v1066 = vpop.f32.mrf.mxu0
        %1067 = vmatprep.mubr.f32.mxu0 0.0
        %1068 = vmatmul.mubr.f32.gmra.mxu0 %v425
        %v1069 = vpop.f32.mrf.mxu0
        %v1070 = vadd.f32 0.0, %v1069
        %v1071 = vpop.f32.mrf.mxu0
        %1072 = vmatprep.mubr.f32.mxu0 0.0
        %1073 = vmatmul.mubr.f32.gmra.mxu0 %v428
        %v1074 = vpop.f32.mrf.mxu0
        %v1075 = vadd.f32 0.0, %v1074
        %v1076 = vpop.f32.mrf.mxu0
        %1077 = vmatprep.mubr.f32.mxu0 0.0
        %1078 = vmatmul.mubr.f32.gmra.mxu0 %v431
        %v1079 = vpop.f32.mrf.mxu0
        %v1080 = vadd.f32 0.0, %v1079
        %v1081 = vpop.f32.mrf.mxu0
        %1082 = vmatprep.mubr.f32.mxu0 0.0
        %1083 = vmatmul.mubr.f32.gmra.mxu0 %v434
        %v1084 = vpop.f32.mrf.mxu0
        %v1085 = vadd.f32 0.0, %v1084
        %v1086 = vpop.f32.mrf.mxu0
        %1087 = vmatprep.mubr.f32.mxu0 0.0
        %1088 = vmatmul.mubr.f32.gmra.mxu0 %v437
        %v1089 = vpop.f32.mrf.mxu0
        %v1090 = vadd.f32 0.0, %v1089
        %v1091 = vpop.f32.mrf.mxu0
        %1092 = vmatprep.mubr.f32.mxu0 0.0
        %1093 = vmatmul.mubr.f32.gmra.mxu0 %v440
        %v1094 = vpop.f32.mrf.mxu0
        %v1095 = vadd.f32 0.0, %v1094
        %v1096 = vpop.f32.mrf.mxu0
        %1097 = vmatprep.mubr.f32.mxu0 0.0
        %1098 = vmatmul.mubr.f32.gmra.mxu0 %v443
        %v1099 = vpop.f32.mrf.mxu0
        %v1100 = vadd.f32 0.0, %v1099
        %v1101 = vpop.f32.mrf.mxu0
        %1102 = vmatprep.mubr.f32.mxu0 0.0
        %1103 = vmatmul.mubr.f32.gmra.mxu0 %v446
        %v1104 = vpop.f32.mrf.mxu0
        %v1105 = vadd.f32 0.0, %v1104
        %v1106 = vpop.f32.mrf.mxu0
        %1107 = vmatprep.mubr.f32.mxu0 0.0
        %1108 = vmatmul.mubr.f32.gmra.mxu0 %v449
        %v1109 = vpop.f32.mrf.mxu0
        %v1110 = vadd.f32 0.0, %v1109
        %v1111 = vpop.f32.mrf.mxu0
        %1112 = vmatprep.mubr.f32.mxu0 0.0
        %1113 = vmatmul.mubr.f32.gmra.mxu0 %v452
        %v1114 = vpop.f32.mrf.mxu0
        %v1115 = vadd.f32 0.0, %v1114
        %v1116 = vpop.f32.mrf.mxu0
        %1117 = vmatprep.mubr.f32.mxu0 0.0
        %1118 = vmatmul.mubr.f32.gmra.mxu0 %v455
        %v1119 = vpop.f32.mrf.mxu0
        %v1120 = vadd.f32 0.0, %v1119
        %v1121 = vpop.f32.mrf.mxu0
        %1122 = vmatprep.mubr.f32.mxu0 0.0
        %1123 = vmatmul.mubr.f32.gmra.mxu0 %v458
        %v1124 = vpop.f32.mrf.mxu0
        %v1125 = vadd.f32 0.0, %v1124
        %v1126 = vpop.f32.mrf.mxu0
        %1127 = vmatprep.mubr.f32.mxu0 0.0
        %1128 = vmatmul.mubr.f32.gmra.mxu0 %v461
        %v1129 = vpop.f32.mrf.mxu0
        %v1130 = vadd.f32 0.0, %v1129
        %v1131 = vpop.f32.mrf.mxu0
        %1132 = vmatprep.mubr.f32.mxu0 0.0
        %1133 = vmatmul.mubr.f32.gmra.mxu0 %v464
        %v1134 = vpop.f32.mrf.mxu0
        %v1135 = vadd.f32 0.0, %v1134
        %v1136 = vpop.f32.mrf.mxu0
        %1137 = vmatprep.mubr.f32.mxu0 0.0
        %1138 = vmatmul.mubr.f32.gmra.mxu0 %v467
        %v1139 = vpop.f32.mrf.mxu0
        %v1140 = vadd.f32 0.0, %v1139
        %v1141 = vpop.f32.mrf.mxu0
        %1142 = vdwg.mxu0
        %v1143 = vadd.f32 %v536, %v538
        %v1144 = vadd.f32 %v1143, %v709
        %v1145 = vadd.f32 %v1144, %v711
        %v1146 = vadd.f32 %v1145, %v882
        %v1147 = vadd.f32 %v1146, %v884
        %vm1148 = vcmask 130048
        %v1149 = vsel %vm1148, %v1055, 0.0
        %v1150 = vadd.f32 %v1147, %v1149
        %1151 = vadd.xlane.f32.xlu0 %v1150
        %v1152 = vpop.xlane.xlu0 %1151
        %v1153 = vadd.f32 %v542, %v544
        %v1154 = vadd.f32 %v1153, %v715
        %v1155 = vadd.f32 %v1154, %v717
        %v1156 = vadd.f32 %v1155, %v888
        %v1157 = vadd.f32 %v1156, %v890
        %v1158 = vsel %vm1148, %v1060, 0.0
        %v1159 = vadd.f32 %v1157, %v1158
        %1160 = vadd.xlane.f32.xlu0 %v1159
        %v1161 = vpop.xlane.xlu0 %1160
        %v1162 = vadd.f32 %v548, %v550
        %v1163 = vadd.f32 %v1162, %v721
        %v1164 = vadd.f32 %v1163, %v723
        %v1165 = vadd.f32 %v1164, %v894
        %v1166 = vadd.f32 %v1165, %v896
        %v1167 = vsel %vm1148, %v1065, 0.0
        %v1168 = vadd.f32 %v1166, %v1167
        %1169 = vadd.xlane.f32.xlu0 %v1168
        %v1170 = vpop.xlane.xlu0 %1169
        %v1171 = vadd.f32 %v554, %v556
        %v1172 = vadd.f32 %v1171, %v727
        %v1173 = vadd.f32 %v1172, %v729
        %v1174 = vadd.f32 %v1173, %v900
        %v1175 = vadd.f32 %v1174, %v902
        %v1176 = vsel %vm1148, %v1070, 0.0
        %v1177 = vadd.f32 %v1175, %v1176
        %1178 = vadd.xlane.f32.xlu0 %v1177
        %v1179 = vpop.xlane.xlu0 %1178
        %v1180 = vadd.f32 %v560, %v562
        %v1181 = vadd.f32 %v1180, %v733
        %v1182 = vadd.f32 %v1181, %v735
        %v1183 = vadd.f32 %v1182, %v906
        %v1184 = vadd.f32 %v1183, %v908
        %v1185 = vsel %vm1148, %v1075, 0.0
        %v1186 = vadd.f32 %v1184, %v1185
        %1187 = vadd.xlane.f32.xlu0 %v1186
        %v1188 = vpop.xlane.xlu0 %1187
        %v1189 = vadd.f32 %v566, %v568
        %v1190 = vadd.f32 %v1189, %v739
        %v1191 = vadd.f32 %v1190, %v741
        %v1192 = vadd.f32 %v1191, %v912
        %v1193 = vadd.f32 %v1192, %v914
        %v1194 = vsel %vm1148, %v1080, 0.0
        %v1195 = vadd.f32 %v1193, %v1194
        %1196 = vadd.xlane.f32.xlu0 %v1195
        %v1197 = vpop.xlane.xlu0 %1196
        %v1198 = vadd.f32 %v572, %v574
        %v1199 = vadd.f32 %v1198, %v745
        %v1200 = vadd.f32 %v1199, %v747
        %v1201 = vadd.f32 %v1200, %v918
        %v1202 = vadd.f32 %v1201, %v920
        %v1203 = vsel %vm1148, %v1085, 0.0
        %v1204 = vadd.f32 %v1202, %v1203
        %1205 = vadd.xlane.f32.xlu0 %v1204
        %v1206 = vpop.xlane.xlu0 %1205
        %v1207 = vadd.f32 %v578, %v580
        %v1208 = vadd.f32 %v1207, %v751
        %v1209 = vadd.f32 %v1208, %v753
        %v1210 = vadd.f32 %v1209, %v924
        %v1211 = vadd.f32 %v1210, %v926
        %v1212 = vsel %vm1148, %v1090, 0.0
        %v1213 = vadd.f32 %v1211, %v1212
        %1214 = vadd.xlane.f32.xlu0 %v1213
        %v1215 = vpop.xlane.xlu0 %1214
        %v1216 = vadd.f32 %v584, %v586
        %v1217 = vadd.f32 %v1216, %v757
        %v1218 = vadd.f32 %v1217, %v759
        %v1219 = vadd.f32 %v1218, %v930
        %v1220 = vadd.f32 %v1219, %v932
        %v1221 = vsel %vm1148, %v1095, 0.0
        %v1222 = vadd.f32 %v1220, %v1221
        %1223 = vadd.xlane.f32.xlu0 %v1222
        %v1224 = vpop.xlane.xlu0 %1223
        %v1225 = vadd.f32 %v590, %v592
        %v1226 = vadd.f32 %v1225, %v763
        %v1227 = vadd.f32 %v1226, %v765
        %v1228 = vadd.f32 %v1227, %v936
        %v1229 = vadd.f32 %v1228, %v938
        %v1230 = vsel %vm1148, %v1100, 0.0
        %v1231 = vadd.f32 %v1229, %v1230
        %1232 = vadd.xlane.f32.xlu0 %v1231
        %v1233 = vpop.xlane.xlu0 %1232
        %v1234 = vadd.f32 %v596, %v598
        %v1235 = vadd.f32 %v1234, %v769
        %v1236 = vadd.f32 %v1235, %v771
        %v1237 = vadd.f32 %v1236, %v942
        %v1238 = vadd.f32 %v1237, %v944
        %v1239 = vsel %vm1148, %v1105, 0.0
        %v1240 = vadd.f32 %v1238, %v1239
        %1241 = vadd.xlane.f32.xlu0 %v1240
        %v1242 = vpop.xlane.xlu0 %1241
        %v1243 = vadd.f32 %v602, %v604
        %v1244 = vadd.f32 %v1243, %v775
        %v1245 = vadd.f32 %v1244, %v777
        %v1246 = vadd.f32 %v1245, %v948
        %v1247 = vadd.f32 %v1246, %v950
        %v1248 = vsel %vm1148, %v1110, 0.0
        %v1249 = vadd.f32 %v1247, %v1248
        %1250 = vadd.xlane.f32.xlu0 %v1249
        %v1251 = vpop.xlane.xlu0 %1250
        %v1252 = vadd.f32 %v608, %v610
        %v1253 = vadd.f32 %v1252, %v781
        %v1254 = vadd.f32 %v1253, %v783
        %v1255 = vadd.f32 %v1254, %v954
        %v1256 = vadd.f32 %v1255, %v956
        %v1257 = vsel %vm1148, %v1115, 0.0
        %v1258 = vadd.f32 %v1256, %v1257
        %1259 = vadd.xlane.f32.xlu0 %v1258
        %v1260 = vpop.xlane.xlu0 %1259
        %v1261 = vadd.f32 %v614, %v616
        %v1262 = vadd.f32 %v1261, %v787
        %v1263 = vadd.f32 %v1262, %v789
        %v1264 = vadd.f32 %v1263, %v960
        %v1265 = vadd.f32 %v1264, %v962
        %v1266 = vsel %vm1148, %v1120, 0.0
        %v1267 = vadd.f32 %v1265, %v1266
        %1268 = vadd.xlane.f32.xlu0 %v1267
        %v1269 = vpop.xlane.xlu0 %1268
        %v1270 = vadd.f32 %v620, %v622
        %v1271 = vadd.f32 %v1270, %v793
        %v1272 = vadd.f32 %v1271, %v795
        %v1273 = vadd.f32 %v1272, %v966
        %v1274 = vadd.f32 %v1273, %v968
        %v1275 = vsel %vm1148, %v1125, 0.0
        %v1276 = vadd.f32 %v1274, %v1275
        %1277 = vadd.xlane.f32.xlu0 %v1276
        %v1278 = vpop.xlane.xlu0 %1277
        %v1279 = vadd.f32 %v626, %v628
        %v1280 = vadd.f32 %v1279, %v799
        %v1281 = vadd.f32 %v1280, %v801
        %v1282 = vadd.f32 %v1281, %v972
        %v1283 = vadd.f32 %v1282, %v974
        %v1284 = vsel %vm1148, %v1130, 0.0
        %v1285 = vadd.f32 %v1283, %v1284
        %1286 = vadd.xlane.f32.xlu0 %v1285
        %v1287 = vpop.xlane.xlu0 %1286
        %v1288 = vadd.f32 %v632, %v634
        %v1289 = vadd.f32 %v1288, %v805
        %v1290 = vadd.f32 %v1289, %v807
        %v1291 = vadd.f32 %v1290, %v978
        %v1292 = vadd.f32 %v1291, %v980
        %v1293 = vsel %vm1148, %v1135, 0.0
        %v1294 = vadd.f32 %v1292, %v1293
        %1295 = vadd.xlane.f32.xlu0 %v1294
        %v1296 = vpop.xlane.xlu0 %1295
        %v1297 = vadd.f32 %v638, %v640
        %v1298 = vadd.f32 %v1297, %v811
        %v1299 = vadd.f32 %v1298, %v813
        %v1300 = vadd.f32 %v1299, %v984
        %v1301 = vadd.f32 %v1300, %v986
        %v1302 = vsel %vm1148, %v1140, 0.0
        %v1303 = vadd.f32 %v1301, %v1302
        %1304 = vadd.xlane.f32.xlu0 %v1303
        %v1305 = vpop.xlane.xlu0 %1304
        %v1306 = vmul.f32 %v536, %v536
        %v1307 = vmul.f32 %v538, %v538
        %v1308 = vmul.f32 %v709, %v709
        %v1309 = vmul.f32 %v711, %v711
        %v1310 = vmul.f32 %v882, %v882
        %v1311 = vmul.f32 %v884, %v884
        %v1312 = vmul.f32 %v1055, %v1055
        %v1313 = vmul.f32 %v542, %v542
        %v1314 = vmul.f32 %v544, %v544
        %v1315 = vmul.f32 %v715, %v715
        %v1316 = vmul.f32 %v717, %v717
        %v1317 = vmul.f32 %v888, %v888
        %v1318 = vmul.f32 %v890, %v890
        %v1319 = vmul.f32 %v1060, %v1060
        %v1320 = vmul.f32 %v548, %v548
        %v1321 = vmul.f32 %v550, %v550
        %v1322 = vmul.f32 %v721, %v721
        %v1323 = vmul.f32 %v723, %v723
        %v1324 = vmul.f32 %v894, %v894
        %v1325 = vmul.f32 %v896, %v896
        %v1326 = vmul.f32 %v1065, %v1065
        %v1327 = vmul.f32 %v554, %v554
        %v1328 = vmul.f32 %v556, %v556
        %v1329 = vmul.f32 %v727, %v727
        %v1330 = vmul.f32 %v729, %v729
        %v1331 = vmul.f32 %v900, %v900
        %v1332 = vmul.f32 %v902, %v902
        %v1333 = vmul.f32 %v1070, %v1070
        %v1334 = vmul.f32 %v560, %v560
        %v1335 = vmul.f32 %v562, %v562
        %v1336 = vmul.f32 %v733, %v733
        %v1337 = vmul.f32 %v735, %v735
        %v1338 = vmul.f32 %v906, %v906
        %v1339 = vmul.f32 %v908, %v908
        %v1340 = vmul.f32 %v1075, %v1075
        %v1341 = vmul.f32 %v566, %v566
        %v1342 = vmul.f32 %v568, %v568
        %v1343 = vmul.f32 %v739, %v739
        %v1344 = vmul.f32 %v741, %v741
        %v1345 = vmul.f32 %v912, %v912
        %v1346 = vmul.f32 %v914, %v914
        %v1347 = vmul.f32 %v1080, %v1080
        %v1348 = vmul.f32 %v572, %v572
        %v1349 = vmul.f32 %v574, %v574
        %v1350 = vmul.f32 %v745, %v745
        %v1351 = vmul.f32 %v747, %v747
        %v1352 = vmul.f32 %v918, %v918
        %v1353 = vmul.f32 %v920, %v920
        %v1354 = vmul.f32 %v1085, %v1085
        %v1355 = vmul.f32 %v578, %v578
        %v1356 = vmul.f32 %v580, %v580
        %v1357 = vmul.f32 %v751, %v751
        %v1358 = vmul.f32 %v753, %v753
        %v1359 = vmul.f32 %v924, %v924
        %v1360 = vmul.f32 %v926, %v926
        %v1361 = vmul.f32 %v1090, %v1090
        %v1362 = vmul.f32 %v584, %v584
        %v1363 = vmul.f32 %v586, %v586
        %v1364 = vmul.f32 %v757, %v757
        %v1365 = vmul.f32 %v759, %v759
        %v1366 = vmul.f32 %v930, %v930
        %v1367 = vmul.f32 %v932, %v932
        %v1368 = vmul.f32 %v1095, %v1095
        %v1369 = vmul.f32 %v590, %v590
        %v1370 = vmul.f32 %v592, %v592
        %v1371 = vmul.f32 %v763, %v763
        %v1372 = vmul.f32 %v765, %v765
        %v1373 = vmul.f32 %v936, %v936
        %v1374 = vmul.f32 %v938, %v938
        %v1375 = vmul.f32 %v1100, %v1100
        %v1376 = vmul.f32 %v596, %v596
        %v1377 = vmul.f32 %v598, %v598
        %v1378 = vmul.f32 %v769, %v769
        %v1379 = vmul.f32 %v771, %v771
        %v1380 = vmul.f32 %v942, %v942
        %v1381 = vmul.f32 %v944, %v944
        %v1382 = vmul.f32 %v1105, %v1105
        %v1383 = vmul.f32 %v602, %v602
        %v1384 = vmul.f32 %v604, %v604
        %v1385 = vmul.f32 %v775, %v775
        %v1386 = vmul.f32 %v777, %v777
        %v1387 = vmul.f32 %v948, %v948
        %v1388 = vmul.f32 %v950, %v950
        %v1389 = vmul.f32 %v1110, %v1110
        %v1390 = vmul.f32 %v608, %v608
        %v1391 = vmul.f32 %v610, %v610
        %v1392 = vmul.f32 %v781, %v781
        %v1393 = vmul.f32 %v783, %v783
        %v1394 = vmul.f32 %v954, %v954
        %v1395 = vmul.f32 %v956, %v956
        %v1396 = vmul.f32 %v1115, %v1115
        %v1397 = vmul.f32 %v614, %v614
        %v1398 = vmul.f32 %v616, %v616
        %v1399 = vmul.f32 %v787, %v787
        %v1400 = vmul.f32 %v789, %v789
        %v1401 = vmul.f32 %v960, %v960
        %v1402 = vmul.f32 %v962, %v962
        %v1403 = vmul.f32 %v1120, %v1120
        %v1404 = vmul.f32 %v620, %v620
        %v1405 = vmul.f32 %v622, %v622
        %v1406 = vmul.f32 %v793, %v793
        %v1407 = vmul.f32 %v795, %v795
        %v1408 = vmul.f32 %v966, %v966
        %v1409 = vmul.f32 %v968, %v968
        %v1410 = vmul.f32 %v1125, %v1125
        %v1411 = vmul.f32 %v626, %v626
        %v1412 = vmul.f32 %v628, %v628
        %v1413 = vmul.f32 %v799, %v799
        %v1414 = vmul.f32 %v801, %v801
        %v1415 = vmul.f32 %v972, %v972
        %v1416 = vmul.f32 %v974, %v974
        %v1417 = vmul.f32 %v1130, %v1130
        %v1418 = vmul.f32 %v632, %v632
        %v1419 = vmul.f32 %v634, %v634
        %v1420 = vmul.f32 %v805, %v805
        %v1421 = vmul.f32 %v807, %v807
        %v1422 = vmul.f32 %v978, %v978
        %v1423 = vmul.f32 %v980, %v980
        %v1424 = vmul.f32 %v1135, %v1135
        %v1425 = vmul.f32 %v638, %v638
        %v1426 = vmul.f32 %v640, %v640
        %v1427 = vmul.f32 %v811, %v811
        %v1428 = vmul.f32 %v813, %v813
        %v1429 = vmul.f32 %v984, %v984
        %v1430 = vmul.f32 %v986, %v986
        %v1431 = vmul.f32 %v1140, %v1140
        %v1432 = vadd.f32 %v1306, %v1307
        %v1433 = vadd.f32 %v1432, %v1308
        %v1434 = vadd.f32 %v1433, %v1309
        %v1435 = vadd.f32 %v1434, %v1310
        %v1436 = vadd.f32 %v1435, %v1311
        %v1437 = vsel %vm1148, %v1312, 0.0
        %v1438 = vadd.f32 %v1436, %v1437
        %1439 = vadd.xlane.f32.xlu0 %v1438
        %v1440 = vpop.xlane.xlu0 %1439
        %v1441 = vadd.f32 %v1313, %v1314
        %v1442 = vadd.f32 %v1441, %v1315
        %v1443 = vadd.f32 %v1442, %v1316
        %v1444 = vadd.f32 %v1443, %v1317
        %v1445 = vadd.f32 %v1444, %v1318
        %v1446 = vsel %vm1148, %v1319, 0.0
        %v1447 = vadd.f32 %v1445, %v1446
        %1448 = vadd.xlane.f32.xlu0 %v1447
        %v1449 = vpop.xlane.xlu0 %1448
        %v1450 = vadd.f32 %v1320, %v1321
        %v1451 = vadd.f32 %v1450, %v1322
        %v1452 = vadd.f32 %v1451, %v1323
        %v1453 = vadd.f32 %v1452, %v1324
        %v1454 = vadd.f32 %v1453, %v1325
        %v1455 = vsel %vm1148, %v1326, 0.0
        %v1456 = vadd.f32 %v1454, %v1455
        %1457 = vadd.xlane.f32.xlu0 %v1456
        %v1458 = vpop.xlane.xlu0 %1457
        %v1459 = vadd.f32 %v1327, %v1328
        %v1460 = vadd.f32 %v1459, %v1329
        %v1461 = vadd.f32 %v1460, %v1330
        %v1462 = vadd.f32 %v1461, %v1331
        %v1463 = vadd.f32 %v1462, %v1332
        %v1464 = vsel %vm1148, %v1333, 0.0
        %v1465 = vadd.f32 %v1463, %v1464
        %1466 = vadd.xlane.f32.xlu0 %v1465
        %v1467 = vpop.xlane.xlu0 %1466
        %v1468 = vadd.f32 %v1334, %v1335
        %v1469 = vadd.f32 %v1468, %v1336
        %v1470 = vadd.f32 %v1469, %v1337
        %v1471 = vadd.f32 %v1470, %v1338
        %v1472 = vadd.f32 %v1471, %v1339
        %v1473 = vsel %vm1148, %v1340, 0.0
        %v1474 = vadd.f32 %v1472, %v1473
        %1475 = vadd.xlane.f32.xlu0 %v1474
        %v1476 = vpop.xlane.xlu0 %1475
        %v1477 = vadd.f32 %v1341, %v1342
        %v1478 = vadd.f32 %v1477, %v1343
        %v1479 = vadd.f32 %v1478, %v1344
        %v1480 = vadd.f32 %v1479, %v1345
        %v1481 = vadd.f32 %v1480, %v1346
        %v1482 = vsel %vm1148, %v1347, 0.0
        %v1483 = vadd.f32 %v1481, %v1482
        %1484 = vadd.xlane.f32.xlu0 %v1483
        %v1485 = vpop.xlane.xlu0 %1484
        %v1486 = vadd.f32 %v1348, %v1349
        %v1487 = vadd.f32 %v1486, %v1350
        %v1488 = vadd.f32 %v1487, %v1351
        %v1489 = vadd.f32 %v1488, %v1352
        %v1490 = vadd.f32 %v1489, %v1353
        %v1491 = vsel %vm1148, %v1354, 0.0
        %v1492 = vadd.f32 %v1490, %v1491
        %1493 = vadd.xlane.f32.xlu0 %v1492
        %v1494 = vpop.xlane.xlu0 %1493
        %v1495 = vadd.f32 %v1355, %v1356
        %v1496 = vadd.f32 %v1495, %v1357
        %v1497 = vadd.f32 %v1496, %v1358
        %v1498 = vadd.f32 %v1497, %v1359
        %v1499 = vadd.f32 %v1498, %v1360
        %v1500 = vsel %vm1148, %v1361, 0.0
        %v1501 = vadd.f32 %v1499, %v1500
        %1502 = vadd.xlane.f32.xlu0 %v1501
        %v1503 = vpop.xlane.xlu0 %1502
        %v1504 = vadd.f32 %v1362, %v1363
        %v1505 = vadd.f32 %v1504, %v1364
        %v1506 = vadd.f32 %v1505, %v1365
        %v1507 = vadd.f32 %v1506, %v1366
        %v1508 = vadd.f32 %v1507, %v1367
        %v1509 = vsel %vm1148, %v1368, 0.0
        %v1510 = vadd.f32 %v1508, %v1509
        %1511 = vadd.xlane.f32.xlu0 %v1510
        %v1512 = vpop.xlane.xlu0 %1511
        %v1513 = vadd.f32 %v1369, %v1370
        %v1514 = vadd.f32 %v1513, %v1371
        %v1515 = vadd.f32 %v1514, %v1372
        %v1516 = vadd.f32 %v1515, %v1373
        %v1517 = vadd.f32 %v1516, %v1374
        %v1518 = vsel %vm1148, %v1375, 0.0
        %v1519 = vadd.f32 %v1517, %v1518
        %1520 = vadd.xlane.f32.xlu0 %v1519
        %v1521 = vpop.xlane.xlu0 %1520
        %v1522 = vadd.f32 %v1376, %v1377
        %v1523 = vadd.f32 %v1522, %v1378
        %v1524 = vadd.f32 %v1523, %v1379
        %v1525 = vadd.f32 %v1524, %v1380
        %v1526 = vadd.f32 %v1525, %v1381
        %v1527 = vsel %vm1148, %v1382, 0.0
        %v1528 = vadd.f32 %v1526, %v1527
        %1529 = vadd.xlane.f32.xlu0 %v1528
        %v1530 = vpop.xlane.xlu0 %1529
        %v1531 = vadd.f32 %v1383, %v1384
        %v1532 = vadd.f32 %v1531, %v1385
        %v1533 = vadd.f32 %v1532, %v1386
        %v1534 = vadd.f32 %v1533, %v1387
        %v1535 = vadd.f32 %v1534, %v1388
        %v1536 = vsel %vm1148, %v1389, 0.0
        %v1537 = vadd.f32 %v1535, %v1536
        %1538 = vadd.xlane.f32.xlu0 %v1537
        %v1539 = vpop.xlane.xlu0 %1538
        %v1540 = vadd.f32 %v1390, %v1391
        %v1541 = vadd.f32 %v1540, %v1392
        %v1542 = vadd.f32 %v1541, %v1393
        %v1543 = vadd.f32 %v1542, %v1394
        %v1544 = vadd.f32 %v1543, %v1395
        %v1545 = vsel %vm1148, %v1396, 0.0
        %v1546 = vadd.f32 %v1544, %v1545
        %1547 = vadd.xlane.f32.xlu0 %v1546
        %v1548 = vpop.xlane.xlu0 %1547
        %v1549 = vadd.f32 %v1397, %v1398
        %v1550 = vadd.f32 %v1549, %v1399
        %v1551 = vadd.f32 %v1550, %v1400
        %v1552 = vadd.f32 %v1551, %v1401
        %v1553 = vadd.f32 %v1552, %v1402
        %v1554 = vsel %vm1148, %v1403, 0.0
        %v1555 = vadd.f32 %v1553, %v1554
        %1556 = vadd.xlane.f32.xlu0 %v1555
        %v1557 = vpop.xlane.xlu0 %1556
        %v1558 = vadd.f32 %v1404, %v1405
        %v1559 = vadd.f32 %v1558, %v1406
        %v1560 = vadd.f32 %v1559, %v1407
        %v1561 = vadd.f32 %v1560, %v1408
        %v1562 = vadd.f32 %v1561, %v1409
        %v1563 = vsel %vm1148, %v1410, 0.0
        %v1564 = vadd.f32 %v1562, %v1563
        %1565 = vadd.xlane.f32.xlu0 %v1564
        %v1566 = vpop.xlane.xlu0 %1565
        %v1567 = vadd.f32 %v1411, %v1412
        %v1568 = vadd.f32 %v1567, %v1413
        %v1569 = vadd.f32 %v1568, %v1414
        %v1570 = vadd.f32 %v1569, %v1415
        %v1571 = vadd.f32 %v1570, %v1416
        %v1572 = vsel %vm1148, %v1417, 0.0
        %v1573 = vadd.f32 %v1571, %v1572
        %1574 = vadd.xlane.f32.xlu0 %v1573
        %v1575 = vpop.xlane.xlu0 %1574
        %v1576 = vadd.f32 %v1418, %v1419
        %v1577 = vadd.f32 %v1576, %v1420
        %v1578 = vadd.f32 %v1577, %v1421
        %v1579 = vadd.f32 %v1578, %v1422
        %v1580 = vadd.f32 %v1579, %v1423
        %v1581 = vsel %vm1148, %v1424, 0.0
        %v1582 = vadd.f32 %v1580, %v1581
        %1583 = vadd.xlane.f32.xlu0 %v1582
        %v1584 = vpop.xlane.xlu0 %1583
        %v1585 = vadd.f32 %v1425, %v1426
        %v1586 = vadd.f32 %v1585, %v1427
        %v1587 = vadd.f32 %v1586, %v1428
        %v1588 = vadd.f32 %v1587, %v1429
        %v1589 = vadd.f32 %v1588, %v1430
        %v1590 = vsel %vm1148, %v1431, 0.0
        %v1591 = vadd.f32 %v1589, %v1590
        %1592 = vadd.xlane.f32.xlu0 %v1591
        %v1593 = vpop.xlane.xlu0 %1592
        %v1594 = vmul.f32 %v1152, 0.0012755102
        %v1595 = vmul.f32 %v1161, 0.0012755102
        %v1596 = vmul.f32 %v1170, 0.0012755102
        %v1597 = vmul.f32 %v1179, 0.0012755102
        %v1598 = vmul.f32 %v1188, 0.0012755102
        %v1599 = vmul.f32 %v1197, 0.0012755102
        %v1600 = vmul.f32 %v1206, 0.0012755102
        %v1601 = vmul.f32 %v1215, 0.0012755102
        %v1602 = vmul.f32 %v1224, 0.0012755102
        %v1603 = vmul.f32 %v1233, 0.0012755102
        %v1604 = vmul.f32 %v1242, 0.0012755102
        %v1605 = vmul.f32 %v1251, 0.0012755102
        %v1606 = vmul.f32 %v1260, 0.0012755102
        %v1607 = vmul.f32 %v1269, 0.0012755102
        %v1608 = vmul.f32 %v1278, 0.0012755102
        %v1609 = vmul.f32 %v1287, 0.0012755102
        %v1610 = vmul.f32 %v1296, 0.0012755102
        %v1611 = vmul.f32 %v1305, 0.0012755102
        %v1612 = vmul.f32 %v1440, 0.0012755102
        %v1613 = vmul.f32 %v1449, 0.0012755102
        %v1614 = vmul.f32 %v1458, 0.0012755102
        %v1615 = vmul.f32 %v1467, 0.0012755102
        %v1616 = vmul.f32 %v1476, 0.0012755102
        %v1617 = vmul.f32 %v1485, 0.0012755102
        %v1618 = vmul.f32 %v1494, 0.0012755102
        %v1619 = vmul.f32 %v1503, 0.0012755102
        %v1620 = vmul.f32 %v1512, 0.0012755102
        %v1621 = vmul.f32 %v1521, 0.0012755102
        %v1622 = vmul.f32 %v1530, 0.0012755102
        %v1623 = vmul.f32 %v1539, 0.0012755102
        %v1624 = vmul.f32 %v1548, 0.0012755102
        %v1625 = vmul.f32 %v1557, 0.0012755102
        %v1626 = vmul.f32 %v1566, 0.0012755102
        %v1627 = vmul.f32 %v1575, 0.0012755102
        %v1628 = vmul.f32 %v1584, 0.0012755102
        %v1629 = vmul.f32 %v1593, 0.0012755102
        %v1630 = vmul.f32 %v1594, %v1594
        %v1631 = vmul.f32 %v1595, %v1595
        %v1632 = vmul.f32 %v1596, %v1596
        %v1633 = vmul.f32 %v1597, %v1597
        %v1634 = vmul.f32 %v1598, %v1598
        %v1635 = vmul.f32 %v1599, %v1599
        %v1636 = vmul.f32 %v1600, %v1600
        %v1637 = vmul.f32 %v1601, %v1601
        %v1638 = vmul.f32 %v1602, %v1602
        %v1639 = vmul.f32 %v1603, %v1603
        %v1640 = vmul.f32 %v1604, %v1604
        %v1641 = vmul.f32 %v1605, %v1605
        %v1642 = vmul.f32 %v1606, %v1606
        %v1643 = vmul.f32 %v1607, %v1607
        %v1644 = vmul.f32 %v1608, %v1608
        %v1645 = vmul.f32 %v1609, %v1609
        %v1646 = vmul.f32 %v1610, %v1610
        %v1647 = vmul.f32 %v1611, %v1611
        %v1648 = vsub.f32 %v1612, %v1630
        %v1649 = vsub.f32 %v1613, %v1631
        %v1650 = vsub.f32 %v1614, %v1632
        %v1651 = vsub.f32 %v1615, %v1633
        %v1652 = vsub.f32 %v1616, %v1634
        %v1653 = vsub.f32 %v1617, %v1635
        %v1654 = vsub.f32 %v1618, %v1636
        %v1655 = vsub.f32 %v1619, %v1637
        %v1656 = vsub.f32 %v1620, %v1638
        %v1657 = vsub.f32 %v1621, %v1639
        %v1658 = vsub.f32 %v1622, %v1640
        %v1659 = vsub.f32 %v1623, %v1641
        %v1660 = vsub.f32 %v1624, %v1642
        %v1661 = vsub.f32 %v1625, %v1643
        %v1662 = vsub.f32 %v1626, %v1644
        %v1663 = vsub.f32 %v1627, %v1645
        %v1664 = vsub.f32 %v1628, %v1646
        %v1665 = vsub.f32 %v1629, %v1647
        %v1666 = vadd.f32 %v1648, 1e-05
        %v1667 = vadd.f32 %v1649, 1e-05
        %v1668 = vadd.f32 %v1650, 1e-05
        %v1669 = vadd.f32 %v1651, 1e-05
        %v1670 = vadd.f32 %v1652, 1e-05
        %v1671 = vadd.f32 %v1653, 1e-05
        %v1672 = vadd.f32 %v1654, 1e-05
        %v1673 = vadd.f32 %v1655, 1e-05
        %v1674 = vadd.f32 %v1656, 1e-05
        %v1675 = vadd.f32 %v1657, 1e-05
        %v1676 = vadd.f32 %v1658, 1e-05
        %v1677 = vadd.f32 %v1659, 1e-05
        %v1678 = vadd.f32 %v1660, 1e-05
        %v1679 = vadd.f32 %v1661, 1e-05
        %v1680 = vadd.f32 %v1662, 1e-05
        %v1681 = vadd.f32 %v1663, 1e-05
        %v1682 = vadd.f32 %v1664, 1e-05
        %v1683 = vadd.f32 %v1665, 1e-05
        %v1684 = vrsqrt.pop %v1666
        %v1685 = vrsqrt.pop %v1667
        %v1686 = vrsqrt.pop %v1668
        %v1687 = vrsqrt.pop %v1669
        %v1688 = vrsqrt.pop %v1670
        %v1689 = vrsqrt.pop %v1671
        %v1690 = vrsqrt.pop %v1672
        %v1691 = vrsqrt.pop %v1673
        %v1692 = vrsqrt.pop %v1674
        %v1693 = vrsqrt.pop %v1675
        %v1694 = vrsqrt.pop %v1676
        %v1695 = vrsqrt.pop %v1677
        %v1696 = vrsqrt.pop %v1678
        %v1697 = vrsqrt.pop %v1679
        %v1698 = vrsqrt.pop %v1680
        %v1699 = vrsqrt.pop %v1681
        %v1700 = vrsqrt.pop %v1682
        %v1701 = vrsqrt.pop %v1683
        %v1702 = vld [vmem:[%s261] sm:$0xff]
        %v1703 = vld [vmem:[%s261 + $0x8] sm:$0xff]
        %v1704 = vld [vmem:[%s261 + $0x10] sm:$0xff]
        %v1705 = vld [vmem:[%s261 + $0x18] sm:$0xff]
        %v1706 = vld [vmem:[%s261 + $0x20] sm:$0xff]
        %v1707 = vld [vmem:[%s261 + $0x28] sm:$0xff]
        %v1708 = vld [vmem:[%s261 + $0x30] sm:$0xff]
        %v1709 = vld [vmem:[%s261 + $0x38] sm:$0xff]
        %v1710 = vld [vmem:[%s261 + $0x40] sm:$0xff]
        %v1711 = vld [vmem:[%s261 + $0x48] sm:$0xff]
        %v1712 = vld [vmem:[%s261 + $0x50] sm:$0xff]
        %v1713 = vld [vmem:[%s261 + $0x58] sm:$0xff]
        %v1714 = vld [vmem:[%s261 + $0x60] sm:$0xff]
        %v1715 = vld [vmem:[%s261 + $0x68] sm:$0xff]
        %v1716 = vld [vmem:[%s261 + $0x70] sm:$0xff]
        %v1717 = vld [vmem:[%s261 + $0x78] sm:$0xff]
        %v1718 = vld [vmem:[%s261 + $0x80] sm:$0xff]
        %v1719 = vld [vmem:[%s261 + $0x88] sm:$0xff]
        %v1720 = vmul.f32 %v1702, %v1684
        %v1721 = vmul.f32 %v1703, %v1685
        %v1722 = vmul.f32 %v1704, %v1686
        %v1723 = vmul.f32 %v1705, %v1687
        %v1724 = vmul.f32 %v1706, %v1688
        %v1725 = vmul.f32 %v1707, %v1689
        %v1726 = vmul.f32 %v1708, %v1690
        %v1727 = vmul.f32 %v1709, %v1691
        %v1728 = vmul.f32 %v1710, %v1692
        %v1729 = vmul.f32 %v1711, %v1693
        %v1730 = vmul.f32 %v1712, %v1694
        %v1731 = vmul.f32 %v1713, %v1695
        %v1732 = vmul.f32 %v1714, %v1696
        %v1733 = vmul.f32 %v1715, %v1697
        %v1734 = vmul.f32 %v1716, %v1698
        %v1735 = vmul.f32 %v1717, %v1699
        %v1736 = vmul.f32 %v1718, %v1700
        %v1737 = vmul.f32 %v1719, %v1701
        %v1738 = vld [vmem:[%s267] sm:$0xff]
        %v1739 = vld [vmem:[%s267 + $0x8] sm:$0xff]
        %v1740 = vld [vmem:[%s267 + $0x10] sm:$0xff]
        %v1741 = vld [vmem:[%s267 + $0x18] sm:$0xff]
        %v1742 = vld [vmem:[%s267 + $0x20] sm:$0xff]
        %v1743 = vld [vmem:[%s267 + $0x28] sm:$0xff]
        %v1744 = vld [vmem:[%s267 + $0x30] sm:$0xff]
        %v1745 = vld [vmem:[%s267 + $0x38] sm:$0xff]
        %v1746 = vld [vmem:[%s267 + $0x40] sm:$0xff]
        %v1747 = vld [vmem:[%s267 + $0x48] sm:$0xff]
        %v1748 = vld [vmem:[%s267 + $0x50] sm:$0xff]
        %v1749 = vld [vmem:[%s267 + $0x58] sm:$0xff]
        %v1750 = vld [vmem:[%s267 + $0x60] sm:$0xff]
        %v1751 = vld [vmem:[%s267 + $0x68] sm:$0xff]
        %v1752 = vld [vmem:[%s267 + $0x70] sm:$0xff]
        %v1753 = vld [vmem:[%s267 + $0x78] sm:$0xff]
        %v1754 = vld [vmem:[%s267 + $0x80] sm:$0xff]
        %v1755 = vld [vmem:[%s267 + $0x88] sm:$0xff]
        %v1756 = vmul.f32 %v1594, %v1720
        %v1757 = vmul.f32 %v1595, %v1721
        %v1758 = vmul.f32 %v1596, %v1722
        %v1759 = vmul.f32 %v1597, %v1723
        %v1760 = vmul.f32 %v1598, %v1724
        %v1761 = vmul.f32 %v1599, %v1725
        %v1762 = vmul.f32 %v1600, %v1726
        %v1763 = vmul.f32 %v1601, %v1727
        %v1764 = vmul.f32 %v1602, %v1728
        %v1765 = vmul.f32 %v1603, %v1729
        %v1766 = vmul.f32 %v1604, %v1730
        %v1767 = vmul.f32 %v1605, %v1731
        %v1768 = vmul.f32 %v1606, %v1732
        %v1769 = vmul.f32 %v1607, %v1733
        %v1770 = vmul.f32 %v1608, %v1734
        %v1771 = vmul.f32 %v1609, %v1735
        %v1772 = vmul.f32 %v1610, %v1736
        %v1773 = vmul.f32 %v1611, %v1737
        %v1774 = vsub.f32 %v1738, %v1756
        %v1775 = vsub.f32 %v1739, %v1757
        %v1776 = vsub.f32 %v1740, %v1758
        %v1777 = vsub.f32 %v1741, %v1759
        %v1778 = vsub.f32 %v1742, %v1760
        %v1779 = vsub.f32 %v1743, %v1761
        %v1780 = vsub.f32 %v1744, %v1762
        %v1781 = vsub.f32 %v1745, %v1763
        %v1782 = vsub.f32 %v1746, %v1764
        %v1783 = vsub.f32 %v1747, %v1765
        %v1784 = vsub.f32 %v1748, %v1766
        %v1785 = vsub.f32 %v1749, %v1767
        %v1786 = vsub.f32 %v1750, %v1768
        %v1787 = vsub.f32 %v1751, %v1769
        %v1788 = vsub.f32 %v1752, %v1770
        %v1789 = vsub.f32 %v1753, %v1771
        %v1790 = vsub.f32 %v1754, %v1772
        %v1791 = vsub.f32 %v1755, %v1773
        %1793 = vset.pattern.permute.xlu0 0
        %1794 = vperm.xlu0 %1793, %v1720
        %v1795 = vpop.permute.xlu0 %1794
        %1798 = vset.pattern.permute.xlu0 0
        %1799 = vperm.xlu0 %1798, %v1721
        %v1800 = vpop.permute.xlu0 %1799
        %1803 = vset.pattern.permute.xlu0 0
        %1804 = vperm.xlu0 %1803, %v1722
        %v1805 = vpop.permute.xlu0 %1804
        %1808 = vset.pattern.permute.xlu0 0
        %1809 = vperm.xlu0 %1808, %v1723
        %v1810 = vpop.permute.xlu0 %1809
        %1813 = vset.pattern.permute.xlu0 0
        %1814 = vperm.xlu0 %1813, %v1724
        %v1815 = vpop.permute.xlu0 %1814
        %1818 = vset.pattern.permute.xlu0 0
        %1819 = vperm.xlu0 %1818, %v1725
        %v1820 = vpop.permute.xlu0 %1819
        %1823 = vset.pattern.permute.xlu0 0
        %1824 = vperm.xlu0 %1823, %v1726
        %v1825 = vpop.permute.xlu0 %1824
        %1828 = vset.pattern.permute.xlu0 0
        %1829 = vperm.xlu0 %1828, %v1727
        %v1830 = vpop.permute.xlu0 %1829
        %1833 = vset.pattern.permute.xlu0 0
        %1834 = vperm.xlu0 %1833, %v1728
        %v1835 = vpop.permute.xlu0 %1834
        %1838 = vset.pattern.permute.xlu0 0
        %1839 = vperm.xlu0 %1838, %v1729
        %v1840 = vpop.permute.xlu0 %1839
        %1843 = vset.pattern.permute.xlu0 0
        %1844 = vperm.xlu0 %1843, %v1730
        %v1845 = vpop.permute.xlu0 %1844
        %1848 = vset.pattern.permute.xlu0 0
        %1849 = vperm.xlu0 %1848, %v1731
        %v1850 = vpop.permute.xlu0 %1849
        %1853 = vset.pattern.permute.xlu0 0
        %1854 = vperm.xlu0 %1853, %v1732
        %v1855 = vpop.permute.xlu0 %1854
        %1858 = vset.pattern.permute.xlu0 0
        %1859 = vperm.xlu0 %1858, %v1733
        %v1860 = vpop.permute.xlu0 %1859
        %1863 = vset.pattern.permute.xlu0 0
        %1864 = vperm.xlu0 %1863, %v1734
        %v1865 = vpop.permute.xlu0 %1864
        %1868 = vset.pattern.permute.xlu0 0
        %1869 = vperm.xlu0 %1868, %v1735
        %v1870 = vpop.permute.xlu0 %1869
        %1873 = vset.pattern.permute.xlu0 0
        %1874 = vperm.xlu0 %1873, %v1736
        %v1875 = vpop.permute.xlu0 %1874
        %1878 = vset.pattern.permute.xlu0 0
        %1879 = vperm.xlu0 %1878, %v1737
        %v1880 = vpop.permute.xlu0 %1879
        %v1882 = vmul.f32 %v536, %v1795
        %v1883 = vmul.f32 %v538, %v1795
        %v1884 = vmul.f32 %v709, %v1795
        %v1885 = vmul.f32 %v711, %v1795
        %v1886 = vmul.f32 %v882, %v1795
        %v1887 = vmul.f32 %v884, %v1795
        %v1888 = vmul.f32 %v1055, %v1795
        %v1889 = vmul.f32 %v542, %v1800
        %v1890 = vmul.f32 %v544, %v1800
        %v1891 = vmul.f32 %v715, %v1800
        %v1892 = vmul.f32 %v717, %v1800
        %v1893 = vmul.f32 %v888, %v1800
        %v1894 = vmul.f32 %v890, %v1800
        %v1895 = vmul.f32 %v1060, %v1800
        %v1896 = vmul.f32 %v548, %v1805
        %v1897 = vmul.f32 %v550, %v1805
        %v1898 = vmul.f32 %v721, %v1805
        %v1899 = vmul.f32 %v723, %v1805
        %v1900 = vmul.f32 %v894, %v1805
        %v1901 = vmul.f32 %v896, %v1805
        %v1902 = vmul.f32 %v1065, %v1805
        %v1903 = vmul.f32 %v554, %v1810
        %v1904 = vmul.f32 %v556, %v1810
        %v1905 = vmul.f32 %v727, %v1810
        %v1906 = vmul.f32 %v729, %v1810
        %v1907 = vmul.f32 %v900, %v1810
        %v1908 = vmul.f32 %v902, %v1810
        %v1909 = vmul.f32 %v1070, %v1810
        %v1910 = vmul.f32 %v560, %v1815
        %v1911 = vmul.f32 %v562, %v1815
        %v1912 = vmul.f32 %v733, %v1815
        %v1913 = vmul.f32 %v735, %v1815
        %v1914 = vmul.f32 %v906, %v1815
        %v1915 = vmul.f32 %v908, %v1815
        %v1916 = vmul.f32 %v1075, %v1815
        %v1917 = vmul.f32 %v566, %v1820
        %v1918 = vmul.f32 %v568, %v1820
        %v1919 = vmul.f32 %v739, %v1820
        %v1920 = vmul.f32 %v741, %v1820
        %v1921 = vmul.f32 %v912, %v1820
        %v1922 = vmul.f32 %v914, %v1820
        %v1923 = vmul.f32 %v1080, %v1820
        %v1924 = vmul.f32 %v572, %v1825
        %v1925 = vmul.f32 %v574, %v1825
        %v1926 = vmul.f32 %v745, %v1825
        %v1927 = vmul.f32 %v747, %v1825
        %v1928 = vmul.f32 %v918, %v1825
        %v1929 = vmul.f32 %v920, %v1825
        %v1930 = vmul.f32 %v1085, %v1825
        %v1931 = vmul.f32 %v578, %v1830
        %v1932 = vmul.f32 %v580, %v1830
        %v1933 = vmul.f32 %v751, %v1830
        %v1934 = vmul.f32 %v753, %v1830
        %v1935 = vmul.f32 %v924, %v1830
        %v1936 = vmul.f32 %v926, %v1830
        %v1937 = vmul.f32 %v1090, %v1830
        %v1938 = vmul.f32 %v584, %v1835
        %v1939 = vmul.f32 %v586, %v1835
        %v1940 = vmul.f32 %v757, %v1835
        %v1941 = vmul.f32 %v759, %v1835
        %v1942 = vmul.f32 %v930, %v1835
        %v1943 = vmul.f32 %v932, %v1835
        %v1944 = vmul.f32 %v1095, %v1835
        %v1945 = vmul.f32 %v590, %v1840
        %v1946 = vmul.f32 %v592, %v1840
        %v1947 = vmul.f32 %v763, %v1840
        %v1948 = vmul.f32 %v765, %v1840
        %v1949 = vmul.f32 %v936, %v1840
        %v1950 = vmul.f32 %v938, %v1840
        %v1951 = vmul.f32 %v1100, %v1840
        %v1952 = vmul.f32 %v596, %v1845
        %v1953 = vmul.f32 %v598, %v1845
        %v1954 = vmul.f32 %v769, %v1845
        %v1955 = vmul.f32 %v771, %v1845
        %v1956 = vmul.f32 %v942, %v1845
        %v1957 = vmul.f32 %v944, %v1845
        %v1958 = vmul.f32 %v1105, %v1845
        %v1959 = vmul.f32 %v602, %v1850
        %v1960 = vmul.f32 %v604, %v1850
        %v1961 = vmul.f32 %v775, %v1850
        %v1962 = vmul.f32 %v777, %v1850
        %v1963 = vmul.f32 %v948, %v1850
        %v1964 = vmul.f32 %v950, %v1850
        %v1965 = vmul.f32 %v1110, %v1850
        %v1966 = vmul.f32 %v608, %v1855
        %v1967 = vmul.f32 %v610, %v1855
        %v1968 = vmul.f32 %v781, %v1855
        %v1969 = vmul.f32 %v783, %v1855
        %v1970 = vmul.f32 %v954, %v1855
        %v1971 = vmul.f32 %v956, %v1855
        %v1972 = vmul.f32 %v1115, %v1855
        %v1973 = vmul.f32 %v614, %v1860
        %v1974 = vmul.f32 %v616, %v1860
        %v1975 = vmul.f32 %v787, %v1860
        %v1976 = vmul.f32 %v789, %v1860
        %v1977 = vmul.f32 %v960, %v1860
        %v1978 = vmul.f32 %v962, %v1860
        %v1979 = vmul.f32 %v1120, %v1860
        %v1980 = vmul.f32 %v620, %v1865
        %v1981 = vmul.f32 %v622, %v1865
        %v1982 = vmul.f32 %v793, %v1865
        %v1983 = vmul.f32 %v795, %v1865
        %v1984 = vmul.f32 %v966, %v1865
        %v1985 = vmul.f32 %v968, %v1865
        %v1986 = vmul.f32 %v1125, %v1865
        %v1987 = vmul.f32 %v626, %v1870
        %v1988 = vmul.f32 %v628, %v1870
        %v1989 = vmul.f32 %v799, %v1870
        %v1990 = vmul.f32 %v801, %v1870
        %v1991 = vmul.f32 %v972, %v1870
        %v1992 = vmul.f32 %v974, %v1870
        %v1993 = vmul.f32 %v1130, %v1870
        %v1994 = vmul.f32 %v632, %v1875
        %v1995 = vmul.f32 %v634, %v1875
        %v1996 = vmul.f32 %v805, %v1875
        %v1997 = vmul.f32 %v807, %v1875
        %v1998 = vmul.f32 %v978, %v1875
        %v1999 = vmul.f32 %v980, %v1875
        %v2000 = vmul.f32 %v1135, %v1875
        %v2001 = vmul.f32 %v638, %v1880
        %v2002 = vmul.f32 %v640, %v1880
        %v2003 = vmul.f32 %v811, %v1880
        %v2004 = vmul.f32 %v813, %v1880
        %v2005 = vmul.f32 %v984, %v1880
        %v2006 = vmul.f32 %v986, %v1880
        %v2007 = vmul.f32 %v1140, %v1880
        %2009 = vset.pattern.permute.xlu0 0
        %2010 = vperm.xlu0 %2009, %v1774
        %v2011 = vpop.permute.xlu0 %2010
        %2014 = vset.pattern.permute.xlu0 0
        %2015 = vperm.xlu0 %2014, %v1775
        %v2016 = vpop.permute.xlu0 %2015
        %2019 = vset.pattern.permute.xlu0 0
        %2020 = vperm.xlu0 %2019, %v1776
        %v2021 = vpop.permute.xlu0 %2020
        %2024 = vset.pattern.permute.xlu0 0
        %2025 = vperm.xlu0 %2024, %v1777
        %v2026 = vpop.permute.xlu0 %2025
        %2029 = vset.pattern.permute.xlu0 0
        %2030 = vperm.xlu0 %2029, %v1778
        %v2031 = vpop.permute.xlu0 %2030
        %2034 = vset.pattern.permute.xlu0 0
        %2035 = vperm.xlu0 %2034, %v1779
        %v2036 = vpop.permute.xlu0 %2035
        %2039 = vset.pattern.permute.xlu0 0
        %2040 = vperm.xlu0 %2039, %v1780
        %v2041 = vpop.permute.xlu0 %2040
        %2044 = vset.pattern.permute.xlu0 0
        %2045 = vperm.xlu0 %2044, %v1781
        %v2046 = vpop.permute.xlu0 %2045
        %2049 = vset.pattern.permute.xlu0 0
        %2050 = vperm.xlu0 %2049, %v1782
        %v2051 = vpop.permute.xlu0 %2050
        %2054 = vset.pattern.permute.xlu0 0
        %2055 = vperm.xlu0 %2054, %v1783
        %v2056 = vpop.permute.xlu0 %2055
        %2059 = vset.pattern.permute.xlu0 0
        %2060 = vperm.xlu0 %2059, %v1784
        %v2061 = vpop.permute.xlu0 %2060
        %2064 = vset.pattern.permute.xlu0 0
        %2065 = vperm.xlu0 %2064, %v1785
        %v2066 = vpop.permute.xlu0 %2065
        %2069 = vset.pattern.permute.xlu0 0
        %2070 = vperm.xlu0 %2069, %v1786
        %v2071 = vpop.permute.xlu0 %2070
        %2074 = vset.pattern.permute.xlu0 0
        %2075 = vperm.xlu0 %2074, %v1787
        %v2076 = vpop.permute.xlu0 %2075
        %2079 = vset.pattern.permute.xlu0 0
        %2080 = vperm.xlu0 %2079, %v1788
        %v2081 = vpop.permute.xlu0 %2080
        %2084 = vset.pattern.permute.xlu0 0
        %2085 = vperm.xlu0 %2084, %v1789
        %v2086 = vpop.permute.xlu0 %2085
        %2089 = vset.pattern.permute.xlu0 0
        %2090 = vperm.xlu0 %2089, %v1790
        %v2091 = vpop.permute.xlu0 %2090
        %2094 = vset.pattern.permute.xlu0 0
        %2095 = vperm.xlu0 %2094, %v1791
        %v2096 = vpop.permute.xlu0 %2095
        %v2098 = vadd.f32 %v1882, %v2011
        %v2099 = vadd.f32 %v1883, %v2011
        %v2100 = vadd.f32 %v1884, %v2011
        %v2101 = vadd.f32 %v1885, %v2011
        %v2102 = vadd.f32 %v1886, %v2011
        %v2103 = vadd.f32 %v1887, %v2011
        %v2104 = vadd.f32 %v1888, %v2011
        %v2105 = vadd.f32 %v1889, %v2016
        %v2106 = vadd.f32 %v1890, %v2016
        %v2107 = vadd.f32 %v1891, %v2016
        %v2108 = vadd.f32 %v1892, %v2016
        %v2109 = vadd.f32 %v1893, %v2016
        %v2110 = vadd.f32 %v1894, %v2016
        %v2111 = vadd.f32 %v1895, %v2016
        %v2112 = vadd.f32 %v1896, %v2021
        %v2113 = vadd.f32 %v1897, %v2021
        %v2114 = vadd.f32 %v1898, %v2021
        %v2115 = vadd.f32 %v1899, %v2021
        %v2116 = vadd.f32 %v1900, %v2021
        %v2117 = vadd.f32 %v1901, %v2021
        %v2118 = vadd.f32 %v1902, %v2021
        %v2119 = vadd.f32 %v1903, %v2026
        %v2120 = vadd.f32 %v1904, %v2026
        %v2121 = vadd.f32 %v1905, %v2026
        %v2122 = vadd.f32 %v1906, %v2026
        %v2123 = vadd.f32 %v1907, %v2026
        %v2124 = vadd.f32 %v1908, %v2026
        %v2125 = vadd.f32 %v1909, %v2026
        %v2126 = vadd.f32 %v1910, %v2031
        %v2127 = vadd.f32 %v1911, %v2031
        %v2128 = vadd.f32 %v1912, %v2031
        %v2129 = vadd.f32 %v1913, %v2031
        %v2130 = vadd.f32 %v1914, %v2031
        %v2131 = vadd.f32 %v1915, %v2031
        %v2132 = vadd.f32 %v1916, %v2031
        %v2133 = vadd.f32 %v1917, %v2036
        %v2134 = vadd.f32 %v1918, %v2036
        %v2135 = vadd.f32 %v1919, %v2036
        %v2136 = vadd.f32 %v1920, %v2036
        %v2137 = vadd.f32 %v1921, %v2036
        %v2138 = vadd.f32 %v1922, %v2036
        %v2139 = vadd.f32 %v1923, %v2036
        %v2140 = vadd.f32 %v1924, %v2041
        %v2141 = vadd.f32 %v1925, %v2041
        %v2142 = vadd.f32 %v1926, %v2041
        %v2143 = vadd.f32 %v1927, %v2041
        %v2144 = vadd.f32 %v1928, %v2041
        %v2145 = vadd.f32 %v1929, %v2041
        %v2146 = vadd.f32 %v1930, %v2041
        %v2147 = vadd.f32 %v1931, %v2046
        %v2148 = vadd.f32 %v1932, %v2046
        %v2149 = vadd.f32 %v1933, %v2046
        %v2150 = vadd.f32 %v1934, %v2046
        %v2151 = vadd.f32 %v1935, %v2046
        %v2152 = vadd.f32 %v1936, %v2046
        %v2153 = vadd.f32 %v1937, %v2046
        %v2154 = vadd.f32 %v1938, %v2051
        %v2155 = vadd.f32 %v1939, %v2051
        %v2156 = vadd.f32 %v1940, %v2051
        %v2157 = vadd.f32 %v1941, %v2051
        %v2158 = vadd.f32 %v1942, %v2051
        %v2159 = vadd.f32 %v1943, %v2051
        %v2160 = vadd.f32 %v1944, %v2051
        %v2161 = vadd.f32 %v1945, %v2056
        %v2162 = vadd.f32 %v1946, %v2056
        %v2163 = vadd.f32 %v1947, %v2056
        %v2164 = vadd.f32 %v1948, %v2056
        %v2165 = vadd.f32 %v1949, %v2056
        %v2166 = vadd.f32 %v1950, %v2056
        %v2167 = vadd.f32 %v1951, %v2056
        %v2168 = vadd.f32 %v1952, %v2061
        %v2169 = vadd.f32 %v1953, %v2061
        %v2170 = vadd.f32 %v1954, %v2061
        %v2171 = vadd.f32 %v1955, %v2061
        %v2172 = vadd.f32 %v1956, %v2061
        %v2173 = vadd.f32 %v1957, %v2061
        %v2174 = vadd.f32 %v1958, %v2061
        %v2175 = vadd.f32 %v1959, %v2066
        %v2176 = vadd.f32 %v1960, %v2066
        %v2177 = vadd.f32 %v1961, %v2066
        %v2178 = vadd.f32 %v1962, %v2066
        %v2179 = vadd.f32 %v1963, %v2066
        %v2180 = vadd.f32 %v1964, %v2066
        %v2181 = vadd.f32 %v1965, %v2066
        %v2182 = vadd.f32 %v1966, %v2071
        %v2183 = vadd.f32 %v1967, %v2071
        %v2184 = vadd.f32 %v1968, %v2071
        %v2185 = vadd.f32 %v1969, %v2071
        %v2186 = vadd.f32 %v1970, %v2071
        %v2187 = vadd.f32 %v1971, %v2071
        %v2188 = vadd.f32 %v1972, %v2071
        %v2189 = vadd.f32 %v1973, %v2076
        %v2190 = vadd.f32 %v1974, %v2076
        %v2191 = vadd.f32 %v1975, %v2076
        %v2192 = vadd.f32 %v1976, %v2076
        %v2193 = vadd.f32 %v1977, %v2076
        %v2194 = vadd.f32 %v1978, %v2076
        %v2195 = vadd.f32 %v1979, %v2076
        %v2196 = vadd.f32 %v1980, %v2081
        %v2197 = vadd.f32 %v1981, %v2081
        %v2198 = vadd.f32 %v1982, %v2081
        %v2199 = vadd.f32 %v1983, %v2081
        %v2200 = vadd.f32 %v1984, %v2081
        %v2201 = vadd.f32 %v1985, %v2081
        %v2202 = vadd.f32 %v1986, %v2081
        %v2203 = vadd.f32 %v1987, %v2086
        %v2204 = vadd.f32 %v1988, %v2086
        %v2205 = vadd.f32 %v1989, %v2086
        %v2206 = vadd.f32 %v1990, %v2086
        %v2207 = vadd.f32 %v1991, %v2086
        %v2208 = vadd.f32 %v1992, %v2086
        %v2209 = vadd.f32 %v1993, %v2086
        %v2210 = vadd.f32 %v1994, %v2091
        %v2211 = vadd.f32 %v1995, %v2091
        %v2212 = vadd.f32 %v1996, %v2091
        %v2213 = vadd.f32 %v1997, %v2091
        %v2214 = vadd.f32 %v1998, %v2091
        %v2215 = vadd.f32 %v1999, %v2091
        %v2216 = vadd.f32 %v2000, %v2091
        %v2217 = vadd.f32 %v2001, %v2096
        %v2218 = vadd.f32 %v2002, %v2096
        %v2219 = vadd.f32 %v2003, %v2096
        %v2220 = vadd.f32 %v2004, %v2096
        %v2221 = vadd.f32 %v2005, %v2096
        %v2222 = vadd.f32 %v2006, %v2096
        %v2223 = vadd.f32 %v2007, %v2096
        %2224 = vst [vmem:[%s250] sm:$0xff] %v2098
        %2225 = vst [vmem:[%s250 + $0x8] sm:$0xff] %v2099
        %2226 = vst [vmem:[%s250 + $0x10] sm:$0xff] %v2100
        %2227 = vst [vmem:[%s250 + $0x18] sm:$0xff] %v2101
        %2228 = vst [vmem:[%s250 + $0x20] sm:$0xff] %v2102
        %2229 = vst [vmem:[%s250 + $0x28] sm:$0xff] %v2103
        %2230 = vst.msk [vmem:[%s250 + $0x30] sm:$0xff] %vm1148, %v2104
        %2231 = vst [vmem:[%s250 + $0x38] sm:$0xff] %v2105
        %2232 = vst [vmem:[%s250 + $0x40] sm:$0xff] %v2106
        %2233 = vst [vmem:[%s250 + $0x48] sm:$0xff] %v2107
        %2234 = vst [vmem:[%s250 + $0x50] sm:$0xff] %v2108
        %2235 = vst [vmem:[%s250 + $0x58] sm:$0xff] %v2109
        %2236 = vst [vmem:[%s250 + $0x60] sm:$0xff] %v2110
        %2237 = vst.msk [vmem:[%s250 + $0x68] sm:$0xff] %vm1148, %v2111
        %2238 = vst [vmem:[%s250 + $0x70] sm:$0xff] %v2112
        %2239 = vst [vmem:[%s250 + $0x78] sm:$0xff] %v2113
        %2240 = vst [vmem:[%s250 + $0x80] sm:$0xff] %v2114
        %2241 = vst [vmem:[%s250 + $0x88] sm:$0xff] %v2115
        %2242 = vst [vmem:[%s250 + $0x90] sm:$0xff] %v2116
        %2243 = vst [vmem:[%s250 + $0x98] sm:$0xff] %v2117
        %2244 = vst.msk [vmem:[%s250 + $0xa0] sm:$0xff] %vm1148, %v2118
        %2245 = vst [vmem:[%s250 + $0xa8] sm:$0xff] %v2119
        %2246 = vst [vmem:[%s250 + $0xb0] sm:$0xff] %v2120
        %2247 = vst [vmem:[%s250 + $0xb8] sm:$0xff] %v2121
        %2248 = vst [vmem:[%s250 + $0xc0] sm:$0xff] %v2122
        %2249 = vst [vmem:[%s250 + $0xc8] sm:$0xff] %v2123
        %2250 = vst [vmem:[%s250 + $0xd0] sm:$0xff] %v2124
        %2251 = vst.msk [vmem:[%s250 + $0xd8] sm:$0xff] %vm1148, %v2125
        %2252 = vst [vmem:[%s250 + $0xe0] sm:$0xff] %v2126
        %2253 = vst [vmem:[%s250 + $0xe8] sm:$0xff] %v2127
        %2254 = vst [vmem:[%s250 + $0xf0] sm:$0xff] %v2128
        %2255 = vst [vmem:[%s250 + $0xf8] sm:$0xff] %v2129
        %2256 = vst [vmem:[%s250 + $0x100] sm:$0xff] %v2130
        %2257 = vst [vmem:[%s250 + $0x108] sm:$0xff] %v2131
        %2258 = vst.msk [vmem:[%s250 + $0x110] sm:$0xff] %vm1148, %v2132
        %2259 = vst [vmem:[%s250 + $0x118] sm:$0xff] %v2133
        %2260 = vst [vmem:[%s250 + $0x120] sm:$0xff] %v2134
        %2261 = vst [vmem:[%s250 + $0x128] sm:$0xff] %v2135
        %2262 = vst [vmem:[%s250 + $0x130] sm:$0xff] %v2136
        %2263 = vst [vmem:[%s250 + $0x138] sm:$0xff] %v2137
        %2264 = vst [vmem:[%s250 + $0x140] sm:$0xff] %v2138
        %2265 = vst.msk [vmem:[%s250 + $0x148] sm:$0xff] %vm1148, %v2139
        %2266 = vst [vmem:[%s250 + $0x150] sm:$0xff] %v2140
        %2267 = vst [vmem:[%s250 + $0x158] sm:$0xff] %v2141
        %2268 = vst [vmem:[%s250 + $0x160] sm:$0xff] %v2142
        %2269 = vst [vmem:[%s250 + $0x168] sm:$0xff] %v2143
        %2270 = vst [vmem:[%s250 + $0x170] sm:$0xff] %v2144
        %2271 = vst [vmem:[%s250 + $0x178] sm:$0xff] %v2145
        %2272 = vst.msk [vmem:[%s250 + $0x180] sm:$0xff] %vm1148, %v2146
        %2273 = vst [vmem:[%s250 + $0x188] sm:$0xff] %v2147
        %2274 = vst [vmem:[%s250 + $0x190] sm:$0xff] %v2148
        %2275 = vst [vmem:[%s250 + $0x198] sm:$0xff] %v2149
        %2276 = vst [vmem:[%s250 + $0x1a0] sm:$0xff] %v2150
        %2277 = vst [vmem:[%s250 + $0x1a8] sm:$0xff] %v2151
        %2278 = vst [vmem:[%s250 + $0x1b0] sm:$0xff] %v2152
        %2279 = vst.msk [vmem:[%s250 + $0x1b8] sm:$0xff] %vm1148, %v2153
        %2280 = vst [vmem:[%s250 + $0x1c0] sm:$0xff] %v2154
        %2281 = vst [vmem:[%s250 + $0x1c8] sm:$0xff] %v2155
        %2282 = vst [vmem:[%s250 + $0x1d0] sm:$0xff] %v2156
        %2283 = vst [vmem:[%s250 + $0x1d8] sm:$0xff] %v2157
        %2284 = vst [vmem:[%s250 + $0x1e0] sm:$0xff] %v2158
        %2285 = vst [vmem:[%s250 + $0x1e8] sm:$0xff] %v2159
        %2286 = vst.msk [vmem:[%s250 + $0x1f0] sm:$0xff] %vm1148, %v2160
        %2287 = vst [vmem:[%s250 + $0x1f8] sm:$0xff] %v2161
        %2288 = vst [vmem:[%s250 + $0x200] sm:$0xff] %v2162
        %2289 = vst [vmem:[%s250 + $0x208] sm:$0xff] %v2163
        %2290 = vst [vmem:[%s250 + $0x210] sm:$0xff] %v2164
        %2291 = vst [vmem:[%s250 + $0x218] sm:$0xff] %v2165
        %2292 = vst [vmem:[%s250 + $0x220] sm:$0xff] %v2166
        %2293 = vst.msk [vmem:[%s250 + $0x228] sm:$0xff] %vm1148, %v2167
        %2294 = vst [vmem:[%s250 + $0x230] sm:$0xff] %v2168
        %2295 = vst [vmem:[%s250 + $0x238] sm:$0xff] %v2169
        %2296 = vst [vmem:[%s250 + $0x240] sm:$0xff] %v2170
        %2297 = vst [vmem:[%s250 + $0x248] sm:$0xff] %v2171
        %2298 = vst [vmem:[%s250 + $0x250] sm:$0xff] %v2172
        %2299 = vst [vmem:[%s250 + $0x258] sm:$0xff] %v2173
        %2300 = vst.msk [vmem:[%s250 + $0x260] sm:$0xff] %vm1148, %v2174
        %2301 = vst [vmem:[%s250 + $0x268] sm:$0xff] %v2175
        %2302 = vst [vmem:[%s250 + $0x270] sm:$0xff] %v2176
        %2303 = vst [vmem:[%s250 + $0x278] sm:$0xff] %v2177
        %2304 = vst [vmem:[%s250 + $0x280] sm:$0xff] %v2178
        %2305 = vst [vmem:[%s250 + $0x288] sm:$0xff] %v2179
        %2306 = vst [vmem:[%s250 + $0x290] sm:$0xff] %v2180
        %2307 = vst.msk [vmem:[%s250 + $0x298] sm:$0xff] %vm1148, %v2181
        %2308 = vst [vmem:[%s250 + $0x2a0] sm:$0xff] %v2182
        %2309 = vst [vmem:[%s250 + $0x2a8] sm:$0xff] %v2183
        %2310 = vst [vmem:[%s250 + $0x2b0] sm:$0xff] %v2184
        %2311 = vst [vmem:[%s250 + $0x2b8] sm:$0xff] %v2185
        %2312 = vst [vmem:[%s250 + $0x2c0] sm:$0xff] %v2186
        %2313 = vst [vmem:[%s250 + $0x2c8] sm:$0xff] %v2187
        %2314 = vst.msk [vmem:[%s250 + $0x2d0] sm:$0xff] %vm1148, %v2188
        %2315 = vst [vmem:[%s250 + $0x2d8] sm:$0xff] %v2189
        %2316 = vst [vmem:[%s250 + $0x2e0] sm:$0xff] %v2190
        %2317 = vst [vmem:[%s250 + $0x2e8] sm:$0xff] %v2191
        %2318 = vst [vmem:[%s250 + $0x2f0] sm:$0xff] %v2192
        %2319 = vst [vmem:[%s250 + $0x2f8] sm:$0xff] %v2193
        %2320 = vst [vmem:[%s250 + $0x300] sm:$0xff] %v2194
        %2321 = vst.msk [vmem:[%s250 + $0x308] sm:$0xff] %vm1148, %v2195
        %2322 = vst [vmem:[%s250 + $0x310] sm:$0xff] %v2196
        %2323 = vst [vmem:[%s250 + $0x318] sm:$0xff] %v2197
        %2324 = vst [vmem:[%s250 + $0x320] sm:$0xff] %v2198
        %2325 = vst [vmem:[%s250 + $0x328] sm:$0xff] %v2199
        %2326 = vst [vmem:[%s250 + $0x330] sm:$0xff] %v2200
        %2327 = vst [vmem:[%s250 + $0x338] sm:$0xff] %v2201
        %2328 = vst.msk [vmem:[%s250 + $0x340] sm:$0xff] %vm1148, %v2202
        %2329 = vst [vmem:[%s250 + $0x348] sm:$0xff] %v2203
        %2330 = vst [vmem:[%s250 + $0x350] sm:$0xff] %v2204
        %2331 = vst [vmem:[%s250 + $0x358] sm:$0xff] %v2205
        %2332 = vst [vmem:[%s250 + $0x360] sm:$0xff] %v2206
        %2333 = vst [vmem:[%s250 + $0x368] sm:$0xff] %v2207
        %2334 = vst [vmem:[%s250 + $0x370] sm:$0xff] %v2208
        %2335 = vst.msk [vmem:[%s250 + $0x378] sm:$0xff] %vm1148, %v2209
        %2336 = vst [vmem:[%s250 + $0x380] sm:$0xff] %v2210
        %2337 = vst [vmem:[%s250 + $0x388] sm:$0xff] %v2211
        %2338 = vst [vmem:[%s250 + $0x390] sm:$0xff] %v2212
        %2339 = vst [vmem:[%s250 + $0x398] sm:$0xff] %v2213
        %2340 = vst [vmem:[%s250 + $0x3a0] sm:$0xff] %v2214
        %2341 = vst [vmem:[%s250 + $0x3a8] sm:$0xff] %v2215
        %2342 = vst.msk [vmem:[%s250 + $0x3b0] sm:$0xff] %vm1148, %v2216
        %2343 = vst [vmem:[%s250 + $0x3b8] sm:$0xff] %v2217
        %2344 = vst [vmem:[%s250 + $0x3c0] sm:$0xff] %v2218
        %2345 = vst [vmem:[%s250 + $0x3c8] sm:$0xff] %v2219
        %2346 = vst [vmem:[%s250 + $0x3d0] sm:$0xff] %v2220
        %2347 = vst [vmem:[%s250 + $0x3d8] sm:$0xff] %v2221
        %2348 = vst [vmem:[%s250 + $0x3e0] sm:$0xff] %v2222
        %2349 = vst.msk [vmem:[%s250 + $0x3e8] sm:$0xff] %vm1148, %v2223
        %s2350 = sand.u32 %s147, 1
        %s2351 = scalar_lea.sflag [#allocation3], %s2350
        %s2352 = sand.u32 %s147, 1
        %s2353 = smul.addr %s2352, 1008
        %s2354 = scalar_lea.vmem [#allocation2], %s2353
        // Predicated region
        $region41: #{tpu_custom_call.1} parent=39 // pred_check
          %p2355 = pneg %p157
        $region42: #{tpu_custom_call.1} parent=39 // pred_check_branch
          %2357 = sbr.rel (%p2355) target = $region44
        $region43: #{tpu_custom_call.1} parent=39 // pred_region
          %s2358 = smul.u32 18, %s19
          %s2360 = ssub.s32 16128, 16128
          %2361 = vsyncadd %s2351, %s2360
          %s2362 = smul.addr %s2358, 7
          %s2363 = smul.addr %s2362, 128
          %s2364 = scalar_lea.hbm %s5, %s2363
          %s2365 = sshll.u32 %s2354, 4
          %s2366 = int_to_ptr.vmem [resolvable:$true] %s2365
          %2371 = dma.vmem_to_hbm [thread:$0]  %s2366, 16128, %s2364, %s2351, 896, 896, 56
        $region44: #{tpu_custom_call.1} parent=39 // pred_fallthru
          _
      $region40: #{tpu_custom_call.1} parent=5 // pred_fallthru
        _
      %p2372 = scmp.le.s32.totalorder 2, %s14
      // Predicated region
      $region45: #{tpu_custom_call.1} parent=5 // pred_check
        %p2373 = pneg %p2372
      $region46: #{tpu_custom_call.1} parent=5 // pred_check_branch
        %2375 = sbr.rel (%p2373) target = $region48
      $region47: #{tpu_custom_call.1} parent=5 // pred_region
        %s2376 = ssub.s32 %s14, 2
        // Predicated region
        $region49: #{tpu_custom_call.1} parent=47 // pred_check
          %p2377 = pneg %p163
        $region50: #{tpu_custom_call.1} parent=47 // pred_check_branch
          %2379 = sbr.rel (%p2377) target = $region52
        $region51: #{tpu_custom_call.1} parent=47 // pred_region
          %s2380 = sand.u32 %s148, 1
          %s2381 = scalar_lea.sflag [#allocation3], %s2380
          %s2382 = sand.u32 %s148, 1
          %s2383 = smul.addr %s2382, 1008
          %s2384 = scalar_lea.vmem [#allocation2], %s2383
          %2385 = dma.done %s2381, 16128
        $region52: #{tpu_custom_call.1} parent=47 // pred_fallthru
          _
      $region48: #{tpu_custom_call.1} parent=5 // pred_fallthru
        _
    $region6: #{tpu_custom_call.1} parent=1 // loop_footer
      %s18 = sadd.s32 1, %s14
    $region7: #{tpu_custom_call.1} parent=1 // loop_footer_branch
      %13 = sbr.rel target = $region3
    $region8: #{tpu_custom_call.1} parent=1 // loop_exit
      _
    %2386 = vsyncpa [#allocation3], 1
    %s2387 = scalar_lea.sflag [#allocation3], 1
    %2388 = vsyncpa %s2387, 1

</llo_original>
